<compile_context>
chip_gen: v7x
topology: tpu7x:2x2x1
jax: 0.10.0
libtpu: 0.0.40
codegen_flags: <defaults>
</compile_context>

<pallas_src>
import functools

import jax
import jax.numpy as jnp
import numpy as np
from jax.experimental import pallas as pl
from jax.experimental.pallas import tpu as pltpu  # noqa: F401  (kept for TPU-specific extensions)


def mhsa_module_kernel(x_ref, gamma_ref, beta_ref, wqkv_ref, bqkv_ref,
                       wo_ref, bo_ref, out_ref, *, B, T, num_heads, eps):
    """Single-step kernel: processes the whole (B*T, D) activation slab."""
    D = x_ref.shape[-1]
    dh = D // num_heads

    # ---- LayerNorm over the last dim (PyTorch nn.LayerNorm semantics, f32) ----
    x = x_ref[...].astype(jnp.float32)                     # (B*T, D)
    mean = jnp.mean(x, axis=-1, keepdims=True)
    xc = x - mean
    var = jnp.mean(xc * xc, axis=-1, keepdims=True)
    x_ln = xc * jax.lax.rsqrt(var + eps)
    x_ln = x_ln * gamma_ref[...] + beta_ref[...]

    # ---- Fused QKV projection: one (B*T, D) @ (D, 3D) MXU matmul ----
    # 1/sqrt(dh) has already been folded into the Q columns by the wrapper.
    qkv = jnp.dot(x_ln, wqkv_ref[...],
                  preferred_element_type=jnp.float32) + bqkv_ref[...]   # (B*T, 3D)

    # ---- Per-head attention; head re-interleave folded into the out-proj ----
    out = jnp.zeros((B * T, D), jnp.float32) + bo_ref[...]
    for h in range(num_heads):
        c0 = h * dh
        qh = qkv[:, c0:c0 + dh].reshape(B, T, dh)                 # (B, T, dh)
        kh = qkv[:, D + c0:D + c0 + dh].reshape(B, T, dh)
        vh = qkv[:, 2 * D + c0:2 * D + c0 + dh].reshape(B, T, dh)

        s = jnp.einsum('bqd,bkd->bqk', qh, kh,
                       preferred_element_type=jnp.float32)        # (B, T, T)
        s = s - jnp.max(s, axis=-1, keepdims=True)
        p = jnp.exp(s)
        denom = jnp.sum(p, axis=-1, keepdims=True)
        p = p * pl.reciprocal(denom, approx=True)                 # EUP reciprocal

        ctx_h = jnp.einsum('bqk,bkd->bqd', p, vh,
                           preferred_element_type=jnp.float32)    # (B, T, dh)

        # Accumulate this head's contribution of the output projection:
        # ctx_h @ Wo[h*dh:(h+1)*dh, :]  — static sublane slice of the weight ref.
        out = out + jnp.dot(ctx_h.reshape(B * T, dh),
                            wo_ref[c0:c0 + dh, :],
                            preferred_element_type=jnp.float32)

    # Dropout(p) is identity in eval mode; single contiguous store.
    out_ref[...] = out.astype(out_ref.dtype)


def mhsa_module_forward(x, params, *, num_heads, eps=1e-5):
    B, T, D = x.shape
    assert D % num_heads == 0, "d_model must be divisible by num_heads"
    dh = D // num_heads
    gamma, beta, wq, bq, wk, bk, wv, bv, wo, bo = params

    # Fuse the three projection weights/biases into one (D, 3D) / (1, 3D) and
    # fold the 1/sqrt(dh) attention scale into the Q columns (trace-time const).
    scale = 1.0 / float(np.sqrt(dh))
    w_qkv = jnp.concatenate([wq * scale, wk, wv], axis=1)
    b_qkv = jnp.concatenate([bq * scale, bk, bv], axis=1)

    x2d = x.reshape(B * T, D)
    kern = functools.partial(mhsa_module_kernel, B=B, T=T,
                             num_heads=num_heads, eps=eps)

    out2d = pl.pallas_call(
        kern,
        out_shape=jax.ShapeDtypeStruct((B * T, D), x.dtype),
    )(x2d, gamma, beta, w_qkv, b_qkv, wo, bo)
    return out2d.reshape(B, T, D)


def reference_forward(x, params, *, num_heads, eps=1e-5):
    """Pure-JAX reference of the same eval-mode forward pass."""
    gamma, beta, wq, bq, wk, bk, wv, bv, wo, bo = params
    x = x.astype(jnp.float32)
    B, T, D = x.shape
    dh = D // num_heads
    mean = x.mean(-1, keepdims=True)
    var = ((x - mean) ** 2).mean(-1, keepdims=True)
    x_ln = (x - mean) / jnp.sqrt(var + eps) * gamma[0] + beta[0]
    q = x_ln @ wq + bq[0]
    k = x_ln @ wk + bk[0]
    v = x_ln @ wv + bv[0]
    q = q.reshape(B, T, num_heads, dh).transpose(0, 2, 1, 3)
    k = k.reshape(B, T, num_heads, dh).transpose(0, 2, 1, 3)
    v = v.reshape(B, T, num_heads, dh).transpose(0, 2, 1, 3)
    s = jnp.einsum("bhqd,bhkd->bhqk", q, k) / np.sqrt(dh)
    p = jax.nn.softmax(s, axis=-1)
    ctx = jnp.einsum("bhqk,bhkd->bhqd", p, v).transpose(0, 2, 1, 3).reshape(B, T, D)
    return ctx @ wo + bo[0]


if __name__ == "__main__":
    # Small shapes consistent with the module: batch=2, seq=8, d_model=32, heads=4.
    B, T, D, H = 2, 8, 32, 4
    dropout_p = 0.1  # identity at inference

    key = jax.random.PRNGKey(0)
    keys = jax.random.split(key, 11)
    scale = 0.1
    x = jax.random.normal(keys[0], (B, T, D), dtype=jnp.float32)

    # Deterministic parameters (nn.LayerNorm(d_model) + q/k/v/out Linear(d_model, d_model)).
    gamma = jnp.ones((1, D), jnp.float32)
    beta = jnp.zeros((1, D), jnp.float32)
    wq = scale * jax.random.normal(keys[1], (D, D), jnp.float32)
    bq = scale * jax.random.normal(keys[2], (1, D), jnp.float32)
    wk = scale * jax.random.normal(keys[3], (D, D), jnp.float32)
    bk = scale * jax.random.normal(keys[4], (1, D), jnp.float32)
    wv = scale * jax.random.normal(keys[5], (D, D), jnp.float32)
    bv = scale * jax.random.normal(keys[6], (1, D), jnp.float32)
    wo = scale * jax.random.normal(keys[7], (D, D), jnp.float32)
    bo = scale * jax.random.normal(keys[8], (1, D), jnp.float32)
    params = (gamma, beta, wq, bq, wk, bk, wv, bv, wo, bo)

    out = mhsa_module_forward(x, params, num_heads=H)
    out = jax.block_until_ready(out)

    ref = jax.block_until_ready(reference_forward(x, params, num_heads=H))
    # Tolerance slightly loosened because the softmax denominator uses the
    # hardware approximate reciprocal (EUP); everything else is exact f32.
    np.testing.assert_allclose(np.asarray(out), np.asarray(ref), rtol=2e-3, atol=2e-3)

    print("KERNEL_OK")
</pallas_src>

<mosaic_0001>
module attributes {stable_mosaic.version = 11 : i64} {
  func.func @mhsa_module_kernel(%arg0: memref<16x32xf32, #tpu.memory_space<vmem>>, %arg1: memref<1x32xf32, #tpu.memory_space<vmem>>, %arg2: memref<1x32xf32, #tpu.memory_space<vmem>>, %arg3: memref<32x96xf32, #tpu.memory_space<vmem>>, %arg4: memref<1x96xf32, #tpu.memory_space<vmem>>, %arg5: memref<32x32xf32, #tpu.memory_space<vmem>>, %arg6: memref<1x32xf32, #tpu.memory_space<vmem>>, %arg7: memref<16x32xf32, #tpu.memory_space<vmem>>) attributes {dimension_semantics = [], scalar_prefetch = 0 : i64, scratch_operands = 0 : i64, tpu.core_type = #tpu.core_type<tc>} {
    %c0 = arith.constant 0 : index
    %c0_0 = arith.constant 0 : index
    %0 = vector.load %arg0[%c0, %c0_0] : memref<16x32xf32, #tpu.memory_space<vmem>>, vector<16x32xf32>
    %cst = arith.constant dense<0.000000e+00> : vector<16xf32>
    %1 = vector.multi_reduction <add>, %0, %cst [1] : vector<16x32xf32> to vector<16xf32>
    %2 = vector.shape_cast %1 : vector<16xf32> to vector<16x1xf32>
    %cst_1 = arith.constant 3.200000e+01 : f32
    %3 = vector.broadcast %cst_1 : f32 to vector<16x1xf32>
    %4 = arith.divf %2, %3 : vector<16x1xf32>
    %5 = vector.broadcast %4 : vector<16x1xf32> to vector<16x32xf32>
    %6 = arith.subf %0, %5 : vector<16x32xf32>
    %7 = arith.mulf %6, %6 : vector<16x32xf32>
    %cst_2 = arith.constant dense<0.000000e+00> : vector<16xf32>
    %8 = vector.multi_reduction <add>, %7, %cst_2 [1] : vector<16x32xf32> to vector<16xf32>
    %9 = vector.shape_cast %8 : vector<16xf32> to vector<16x1xf32>
    %cst_3 = arith.constant 3.200000e+01 : f32
    %10 = vector.broadcast %cst_3 : f32 to vector<16x1xf32>
    %11 = arith.divf %9, %10 : vector<16x1xf32>
    %cst_4 = arith.constant 9.99999974E-6 : f32
    %12 = vector.broadcast %cst_4 : f32 to vector<16x1xf32>
    %13 = arith.addf %11, %12 : vector<16x1xf32>
    %14 = math.rsqrt %13 : vector<16x1xf32>
    %15 = vector.broadcast %14 : vector<16x1xf32> to vector<16x32xf32>
    %16 = arith.mulf %6, %15 : vector<16x32xf32>
    %c0_5 = arith.constant 0 : index
    %c0_6 = arith.constant 0 : index
    %17 = vector.load %arg1[%c0_5, %c0_6] : memref<1x32xf32, #tpu.memory_space<vmem>>, vector<1x32xf32>
    %18 = vector.broadcast %17 : vector<1x32xf32> to vector<16x32xf32>
    %19 = arith.mulf %16, %18 : vector<16x32xf32>
    %c0_7 = arith.constant 0 : index
    %c0_8 = arith.constant 0 : index
    %20 = vector.load %arg2[%c0_7, %c0_8] : memref<1x32xf32, #tpu.memory_space<vmem>>, vector<1x32xf32>
    %21 = vector.broadcast %20 : vector<1x32xf32> to vector<16x32xf32>
    %22 = arith.addf %19, %21 : vector<16x32xf32>
    %c0_9 = arith.constant 0 : index
    %c0_10 = arith.constant 0 : index
    %23 = vector.load %arg3[%c0_9, %c0_10] : memref<32x96xf32, #tpu.memory_space<vmem>>, vector<32x96xf32>
    %cst_11 = arith.constant dense<0.000000e+00> : vector<16x96xf32>
    %24 = tpu.matmul %22, %23, %cst_11 {dimension_numbers = #tpu.dot_dimension_numbers<[1], [0], [0], [1], [0, 0, 1, 1], [], []>} : vector<16x32xf32>, vector<32x96xf32>, vector<16x96xf32> -> vector<16x96xf32>
    %c0_12 = arith.constant 0 : index
    %c0_13 = arith.constant 0 : index
    %25 = vector.load %arg4[%c0_12, %c0_13] : memref<1x96xf32, #tpu.memory_space<vmem>>, vector<1x96xf32>
    %26 = vector.broadcast %25 : vector<1x96xf32> to vector<16x96xf32>
    %27 = arith.addf %24, %26 : vector<16x96xf32>
    %cst_14 = arith.constant 0.000000e+00 : f32
    %28 = vector.broadcast %cst_14 : f32 to vector<16x32xf32>
    %c0_15 = arith.constant 0 : index
    %c0_16 = arith.constant 0 : index
    %29 = vector.load %arg6[%c0_15, %c0_16] : memref<1x32xf32, #tpu.memory_space<vmem>>, vector<1x32xf32>
    %30 = vector.broadcast %29 : vector<1x32xf32> to vector<16x32xf32>
    %31 = arith.addf %28, %30 : vector<16x32xf32>
    %32 = vector.extract_strided_slice %27 {offsets = [0, 0], sizes = [16, 8], strides = [1, 1]} : vector<16x96xf32> to vector<16x8xf32>
    %33 = vector.shape_cast %32 : vector<16x8xf32> to vector<2x8x8xf32>
    %34 = vector.extract_strided_slice %27 {offsets = [0, 32], sizes = [16, 8], strides = [1, 1]} : vector<16x96xf32> to vector<16x8xf32>
    %35 = vector.shape_cast %34 : vector<16x8xf32> to vector<2x8x8xf32>
    %36 = vector.extract_strided_slice %27 {offsets = [0, 64], sizes = [16, 8], strides = [1, 1]} : vector<16x96xf32> to vector<16x8xf32>
    %37 = vector.shape_cast %36 : vector<16x8xf32> to vector<2x8x8xf32>
    "tpu.trace_start"() <{level = 10 : i32, message = "bqd,bkd->bqk"}> : () -> ()
    %cst_17 = arith.constant dense<0.000000e+00> : vector<2x8x8xf32>
    %38 = tpu.matmul %33, %35, %cst_17 {dimension_numbers = #tpu.dot_dimension_numbers<[2], [2], [1], [1], [0, 0, 0, 1, 1, 1], [0], [0]>} : vector<2x8x8xf32>, vector<2x8x8xf32>, vector<2x8x8xf32> -> vector<2x8x8xf32>
    "tpu.trace_stop"() : () -> ()
    %cst_18 = arith.constant dense<0xFF800000> : vector<2x8xf32>
    %39 = vector.multi_reduction <maximumf>, %38, %cst_18 [2] : vector<2x8x8xf32> to vector<2x8xf32>
    %40 = vector.shape_cast %39 : vector<2x8xf32> to vector<2x8x1xf32>
    %41 = vector.broadcast %40 : vector<2x8x1xf32> to vector<2x8x8xf32>
    %42 = arith.subf %38, %41 : vector<2x8x8xf32>
    %43 = math.exp %42 : vector<2x8x8xf32>
    %cst_19 = arith.constant dense<0.000000e+00> : vector<2x8xf32>
    %44 = vector.multi_reduction <add>, %43, %cst_19 [2] : vector<2x8x8xf32> to vector<2x8xf32>
    %45 = vector.shape_cast %44 : vector<2x8xf32> to vector<2x8x1xf32>
    %46 = tpu.reciprocal %45 {approx = true} : vector<2x8x1xf32> -> vector<2x8x1xf32>
    %47 = vector.broadcast %46 : vector<2x8x1xf32> to vector<2x8x8xf32>
    %48 = arith.mulf %43, %47 : vector<2x8x8xf32>
    "tpu.trace_start"() <{level = 10 : i32, message = "bqk,bkd->bqd"}> : () -> ()
    %cst_20 = arith.constant dense<0.000000e+00> : vector<2x8x8xf32>
    %49 = tpu.matmul %48, %37, %cst_20 {dimension_numbers = #tpu.dot_dimension_numbers<[2], [1], [1], [2], [0, 0, 0, 1, 1, 2], [0], [0]>} : vector<2x8x8xf32>, vector<2x8x8xf32>, vector<2x8x8xf32> -> vector<2x8x8xf32>
    "tpu.trace_stop"() : () -> ()
    %50 = vector.shape_cast %49 : vector<2x8x8xf32> to vector<16x8xf32>
    %c0_21 = arith.constant 0 : index
    %c0_22 = arith.constant 0 : index
    %51 = vector.load %arg5[%c0_21, %c0_22] : memref<32x32xf32, #tpu.memory_space<vmem>>, vector<8x32xf32>
    %cst_23 = arith.constant dense<0.000000e+00> : vector<16x32xf32>
    %52 = tpu.matmul %50, %51, %cst_23 {dimension_numbers = #tpu.dot_dimension_numbers<[1], [0], [0], [1], [0, 0, 1, 1], [], []>} : vector<16x8xf32>, vector<8x32xf32>, vector<16x32xf32> -> vector<16x32xf32>
    %53 = arith.addf %31, %52 : vector<16x32xf32>
    %54 = vector.extract_strided_slice %27 {offsets = [0, 8], sizes = [16, 8], strides = [1, 1]} : vector<16x96xf32> to vector<16x8xf32>
    %55 = vector.shape_cast %54 : vector<16x8xf32> to vector<2x8x8xf32>
    %56 = vector.extract_strided_slice %27 {offsets = [0, 40], sizes = [16, 8], strides = [1, 1]} : vector<16x96xf32> to vector<16x8xf32>
    %57 = vector.shape_cast %56 : vector<16x8xf32> to vector<2x8x8xf32>
    %58 = vector.extract_strided_slice %27 {offsets = [0, 72], sizes = [16, 8], strides = [1, 1]} : vector<16x96xf32> to vector<16x8xf32>
    %59 = vector.shape_cast %58 : vector<16x8xf32> to vector<2x8x8xf32>
    "tpu.trace_start"() <{level = 10 : i32, message = "bqd,bkd->bqk"}> : () -> ()
    %cst_24 = arith.constant dense<0.000000e+00> : vector<2x8x8xf32>
    %60 = tpu.matmul %55, %57, %cst_24 {dimension_numbers = #tpu.dot_dimension_numbers<[2], [2], [1], [1], [0, 0, 0, 1, 1, 1], [0], [0]>} : vector<2x8x8xf32>, vector<2x8x8xf32>, vector<2x8x8xf32> -> vector<2x8x8xf32>
    "tpu.trace_stop"() : () -> ()
    %cst_25 = arith.constant dense<0xFF800000> : vector<2x8xf32>
    %61 = vector.multi_reduction <maximumf>, %60, %cst_25 [2] : vector<2x8x8xf32> to vector<2x8xf32>
    %62 = vector.shape_cast %61 : vector<2x8xf32> to vector<2x8x1xf32>
    %63 = vector.broadcast %62 : vector<2x8x1xf32> to vector<2x8x8xf32>
    %64 = arith.subf %60, %63 : vector<2x8x8xf32>
    %65 = math.exp %64 : vector<2x8x8xf32>
    %cst_26 = arith.constant dense<0.000000e+00> : vector<2x8xf32>
    %66 = vector.multi_reduction <add>, %65, %cst_26 [2] : vector<2x8x8xf32> to vector<2x8xf32>
    %67 = vector.shape_cast %66 : vector<2x8xf32> to vector<2x8x1xf32>
    %68 = tpu.reciprocal %67 {approx = true} : vector<2x8x1xf32> -> vector<2x8x1xf32>
    %69 = vector.broadcast %68 : vector<2x8x1xf32> to vector<2x8x8xf32>
    %70 = arith.mulf %65, %69 : vector<2x8x8xf32>
    "tpu.trace_start"() <{level = 10 : i32, message = "bqk,bkd->bqd"}> : () -> ()
    %cst_27 = arith.constant dense<0.000000e+00> : vector<2x8x8xf32>
    %71 = tpu.matmul %70, %59, %cst_27 {dimension_numbers = #tpu.dot_dimension_numbers<[2], [1], [1], [2], [0, 0, 0, 1, 1, 2], [0], [0]>} : vector<2x8x8xf32>, vector<2x8x8xf32>, vector<2x8x8xf32> -> vector<2x8x8xf32>
    "tpu.trace_stop"() : () -> ()
    %72 = vector.shape_cast %71 : vector<2x8x8xf32> to vector<16x8xf32>
    %c8 = arith.constant 8 : index
    %c0_28 = arith.constant 0 : index
    %73 = vector.load %arg5[%c8, %c0_28] : memref<32x32xf32, #tpu.memory_space<vmem>>, vector<8x32xf32>
    %cst_29 = arith.constant dense<0.000000e+00> : vector<16x32xf32>
    %74 = tpu.matmul %72, %73, %cst_29 {dimension_numbers = #tpu.dot_dimension_numbers<[1], [0], [0], [1], [0, 0, 1, 1], [], []>} : vector<16x8xf32>, vector<8x32xf32>, vector<16x32xf32> -> vector<16x32xf32>
    %75 = arith.addf %53, %74 : vector<16x32xf32>
    %76 = vector.extract_strided_slice %27 {offsets = [0, 16], sizes = [16, 8], strides = [1, 1]} : vector<16x96xf32> to vector<16x8xf32>
    %77 = vector.shape_cast %76 : vector<16x8xf32> to vector<2x8x8xf32>
    %78 = vector.extract_strided_slice %27 {offsets = [0, 48], sizes = [16, 8], strides = [1, 1]} : vector<16x96xf32> to vector<16x8xf32>
    %79 = vector.shape_cast %78 : vector<16x8xf32> to vector<2x8x8xf32>
    %80 = vector.extract_strided_slice %27 {offsets = [0, 80], sizes = [16, 8], strides = [1, 1]} : vector<16x96xf32> to vector<16x8xf32>
    %81 = vector.shape_cast %80 : vector<16x8xf32> to vector<2x8x8xf32>
    "tpu.trace_start"() <{level = 10 : i32, message = "bqd,bkd->bqk"}> : () -> ()
    %cst_30 = arith.constant dense<0.000000e+00> : vector<2x8x8xf32>
    %82 = tpu.matmul %77, %79, %cst_30 {dimension_numbers = #tpu.dot_dimension_numbers<[2], [2], [1], [1], [0, 0, 0, 1, 1, 1], [0], [0]>} : vector<2x8x8xf32>, vector<2x8x8xf32>, vector<2x8x8xf32> -> vector<2x8x8xf32>
    "tpu.trace_stop"() : () -> ()
    %cst_31 = arith.constant dense<0xFF800000> : vector<2x8xf32>
    %83 = vector.multi_reduction <maximumf>, %82, %cst_31 [2] : vector<2x8x8xf32> to vector<2x8xf32>
    %84 = vector.shape_cast %83 : vector<2x8xf32> to vector<2x8x1xf32>
    %85 = vector.broadcast %84 : vector<2x8x1xf32> to vector<2x8x8xf32>
    %86 = arith.subf %82, %85 : vector<2x8x8xf32>
    %87 = math.exp %86 : vector<2x8x8xf32>
    %cst_32 = arith.constant dense<0.000000e+00> : vector<2x8xf32>
    %88 = vector.multi_reduction <add>, %87, %cst_32 [2] : vector<2x8x8xf32> to vector<2x8xf32>
    %89 = vector.shape_cast %88 : vector<2x8xf32> to vector<2x8x1xf32>
    %90 = tpu.reciprocal %89 {approx = true} : vector<2x8x1xf32> -> vector<2x8x1xf32>
    %91 = vector.broadcast %90 : vector<2x8x1xf32> to vector<2x8x8xf32>
    %92 = arith.mulf %87, %91 : vector<2x8x8xf32>
    "tpu.trace_start"() <{level = 10 : i32, message = "bqk,bkd->bqd"}> : () -> ()
    %cst_33 = arith.constant dense<0.000000e+00> : vector<2x8x8xf32>
    %93 = tpu.matmul %92, %81, %cst_33 {dimension_numbers = #tpu.dot_dimension_numbers<[2], [1], [1], [2], [0, 0, 0, 1, 1, 2], [0], [0]>} : vector<2x8x8xf32>, vector<2x8x8xf32>, vector<2x8x8xf32> -> vector<2x8x8xf32>
    "tpu.trace_stop"() : () -> ()
    %94 = vector.shape_cast %93 : vector<2x8x8xf32> to vector<16x8xf32>
    %c16 = arith.constant 16 : index
    %c0_34 = arith.constant 0 : index
    %95 = vector.load %arg5[%c16, %c0_34] : memref<32x32xf32, #tpu.memory_space<vmem>>, vector<8x32xf32>
    %cst_35 = arith.constant dense<0.000000e+00> : vector<16x32xf32>
    %96 = tpu.matmul %94, %95, %cst_35 {dimension_numbers = #tpu.dot_dimension_numbers<[1], [0], [0], [1], [0, 0, 1, 1], [], []>} : vector<16x8xf32>, vector<8x32xf32>, vector<16x32xf32> -> vector<16x32xf32>
    %97 = arith.addf %75, %96 : vector<16x32xf32>
    %98 = vector.extract_strided_slice %27 {offsets = [0, 24], sizes = [16, 8], strides = [1, 1]} : vector<16x96xf32> to vector<16x8xf32>
    %99 = vector.shape_cast %98 : vector<16x8xf32> to vector<2x8x8xf32>
    %100 = vector.extract_strided_slice %27 {offsets = [0, 56], sizes = [16, 8], strides = [1, 1]} : vector<16x96xf32> to vector<16x8xf32>
    %101 = vector.shape_cast %100 : vector<16x8xf32> to vector<2x8x8xf32>
    %102 = vector.extract_strided_slice %27 {offsets = [0, 88], sizes = [16, 8], strides = [1, 1]} : vector<16x96xf32> to vector<16x8xf32>
    %103 = vector.shape_cast %102 : vector<16x8xf32> to vector<2x8x8xf32>
    "tpu.trace_start"() <{level = 10 : i32, message = "bqd,bkd->bqk"}> : () -> ()
    %cst_36 = arith.constant dense<0.000000e+00> : vector<2x8x8xf32>
    %104 = tpu.matmul %99, %101, %cst_36 {dimension_numbers = #tpu.dot_dimension_numbers<[2], [2], [1], [1], [0, 0, 0, 1, 1, 1], [0], [0]>} : vector<2x8x8xf32>, vector<2x8x8xf32>, vector<2x8x8xf32> -> vector<2x8x8xf32>
    "tpu.trace_stop"() : () -> ()
    %cst_37 = arith.constant dense<0xFF800000> : vector<2x8xf32>
    %105 = vector.multi_reduction <maximumf>, %104, %cst_37 [2] : vector<2x8x8xf32> to vector<2x8xf32>
    %106 = vector.shape_cast %105 : vector<2x8xf32> to vector<2x8x1xf32>
    %107 = vector.broadcast %106 : vector<2x8x1xf32> to vector<2x8x8xf32>
    %108 = arith.subf %104, %107 : vector<2x8x8xf32>
    %109 = math.exp %108 : vector<2x8x8xf32>
    %cst_38 = arith.constant dense<0.000000e+00> : vector<2x8xf32>
    %110 = vector.multi_reduction <add>, %109, %cst_38 [2] : vector<2x8x8xf32> to vector<2x8xf32>
    %111 = vector.shape_cast %110 : vector<2x8xf32> to vector<2x8x1xf32>
    %112 = tpu.reciprocal %111 {approx = true} : vector<2x8x1xf32> -> vector<2x8x1xf32>
    %113 = vector.broadcast %112 : vector<2x8x1xf32> to vector<2x8x8xf32>
    %114 = arith.mulf %109, %113 : vector<2x8x8xf32>
    "tpu.trace_start"() <{level = 10 : i32, message = "bqk,bkd->bqd"}> : () -> ()
    %cst_39 = arith.constant dense<0.000000e+00> : vector<2x8x8xf32>
    %115 = tpu.matmul %114, %103, %cst_39 {dimension_numbers = #tpu.dot_dimension_numbers<[2], [1], [1], [2], [0, 0, 0, 1, 1, 2], [0], [0]>} : vector<2x8x8xf32>, vector<2x8x8xf32>, vector<2x8x8xf32> -> vector<2x8x8xf32>
    "tpu.trace_stop"() : () -> ()
    %116 = vector.shape_cast %115 : vector<2x8x8xf32> to vector<16x8xf32>
    %c24 = arith.constant 24 : index
    %c0_40 = arith.constant 0 : index
    %117 = vector.load %arg5[%c24, %c0_40] : memref<32x32xf32, #tpu.memory_space<vmem>>, vector<8x32xf32>
    %cst_41 = arith.constant dense<0.000000e+00> : vector<16x32xf32>
    %118 = tpu.matmul %116, %117, %cst_41 {dimension_numbers = #tpu.dot_dimension_numbers<[1], [0], [0], [1], [0, 0, 1, 1], [], []>} : vector<16x8xf32>, vector<8x32xf32>, vector<16x32xf32> -> vector<16x32xf32>
    %119 = arith.addf %97, %118 : vector<16x32xf32>
    %c0_42 = arith.constant 0 : index
    %c0_43 = arith.constant 0 : index
    %120 = vector.load %arg7[%c0_42, %c0_43] : memref<16x32xf32, #tpu.memory_space<vmem>>, vector<16x32xf32>
    tpu.vector_store %arg7[%c0_42, %c0_43], %119 {strides = array<i32>} : memref<16x32xf32, #tpu.memory_space<vmem>>, vector<16x32xf32>,
    return
  }
}

</mosaic_0001>

<llo_original>
// kernel: tpu_custom_call.1
$region0: #{tpu_custom_call.1}
  #allocation0 [shape = 'u32[]', space=smem, size = 0x4, offset = 0x4, fixed_abs, tag = 'smem constant byte address 0x4 - core index']
  #allocation1 [shape = 'u32[144,128]{1,0:T(1,128)}', space=vmem, size = 0x12000, scoped, tag = 'internal scratch']
  %s0 = inlined_call_operand.hbm [shape: f32[16,32], index: 0, kind: input, shape index: {}]
  %s1 = inlined_call_operand.vmem [shape: f32[1,32], index: 1, kind: input, shape index: {}]
  %s2 = inlined_call_operand.vmem [shape: f32[1,32], index: 2, kind: input, shape index: {}]
  %s3 = inlined_call_operand.hbm [shape: f32[32,96], index: 3, kind: input, shape index: {}]
  %s4 = inlined_call_operand.vmem [shape: f32[1,96], index: 4, kind: input, shape index: {}]
  %s5 = inlined_call_operand.hbm [shape: f32[32,32], index: 5, kind: input, shape index: {}]
  %s6 = inlined_call_operand.vmem [shape: f32[1,32], index: 6, kind: input, shape index: {}]
  %s7 = inlined_call_operand.hbm [shape: f32[16,32], index: 7, kind: output, shape index: {}]
  %s8 = sld [smem:[#allocation0]]
  $region50: #{tpu_custom_call.1} parent=0
    _
  %s10 = ssub.s32 1, %s8
  %s11 = scalar_select 0, %s10, %s8
  $region1: #{tpu_custom_call.1} parent=0
    #allocation2 [shape = 'u8[8192]{0}', space=vmem, size = 0x2000, scoped, tag = 'input window, operand 0, single buffered']
    #allocation3 [shape = 's32[1]{0}', space=sflag, size = 0x4, scoped, tag = 'scoped memory for tpu_custom_call.1']
    #allocation4 [shape = 's32[1]{0}', space=sflag, size = 0x4, scoped, tag = 'scoped memory for tpu_custom_call.1']
    #allocation5 [shape = 'u8[16384]{0}', space=vmem, size = 0x4000, scoped, tag = 'input window, operand 3, single buffered']
    #allocation6 [shape = 's32[1]{0}', space=sflag, size = 0x4, scoped, tag = 'scoped memory for tpu_custom_call.1']
    #allocation7 [shape = 'u8[16384]{0}', space=vmem, size = 0x4000, scoped, tag = 'input window, operand 5, single buffered']
    #allocation8 [shape = 'u8[8192]{0}', space=vmem, size = 0x2000, scoped, tag = 'output window, operand 0, single buffered']
    %12 = vsyncpa [#allocation3], 0
    %13 = vsyncpa [#allocation6], 0
    %14 = vsyncpa [#allocation4], 0
    // Predicated region
    $region2: #{tpu_custom_call.1} parent=1 // pred_check
      _
    $region3: #{tpu_custom_call.1} parent=1 // pred_check_branch
      %16 = sbr.rel (0) target = $region5
    $region4: #{tpu_custom_call.1} parent=1 // pred_region
      %s18 = ssub.s32 256, 256
      %19 = vsyncadd [#allocation3], %s18
      %s20 = sshll.u32 [#allocation2], 4
      %s21 = int_to_ptr.vmem [resolvable:$true] %s20
      %26 = dma.hbm_to_vmem [thread:$0]  %s0, 256, %s21, [#allocation3], 128, 128, 8
    $region5: #{tpu_custom_call.1} parent=1 // pred_fallthru
      _
    // Predicated region
    $region6: #{tpu_custom_call.1} parent=1 // pred_check
      _
    $region7: #{tpu_custom_call.1} parent=1 // pred_check_branch
      %28 = sbr.rel (0) target = $region9
    $region8: #{tpu_custom_call.1} parent=1 // pred_region
      _
    $region9: #{tpu_custom_call.1} parent=1 // pred_fallthru
      _
    // Predicated region
    $region10: #{tpu_custom_call.1} parent=1 // pred_check
      _
    $region11: #{tpu_custom_call.1} parent=1 // pred_check_branch
      %30 = sbr.rel (0) target = $region13
    $region12: #{tpu_custom_call.1} parent=1 // pred_region
      _
    $region13: #{tpu_custom_call.1} parent=1 // pred_fallthru
      _
    // Predicated region
    $region14: #{tpu_custom_call.1} parent=1 // pred_check
      _
    $region15: #{tpu_custom_call.1} parent=1 // pred_check_branch
      %32 = sbr.rel (0) target = $region17
    $region16: #{tpu_custom_call.1} parent=1 // pred_region
      %s34 = ssub.s32 512, 512
      %35 = vsyncadd [#allocation6], %s34
      %s36 = sshll.u32 [#allocation5], 4
      %s37 = int_to_ptr.vmem [resolvable:$true] %s36
      %42 = dma.hbm_to_vmem [thread:$0]  %s3, 512, %s37, [#allocation6], 128, 128, 8
    $region17: #{tpu_custom_call.1} parent=1 // pred_fallthru
      _
    // Predicated region
    $region18: #{tpu_custom_call.1} parent=1 // pred_check
      _
    $region19: #{tpu_custom_call.1} parent=1 // pred_check_branch
      %44 = sbr.rel (0) target = $region21
    $region20: #{tpu_custom_call.1} parent=1 // pred_region
      _
    $region21: #{tpu_custom_call.1} parent=1 // pred_fallthru
      _
    // Predicated region
    $region22: #{tpu_custom_call.1} parent=1 // pred_check
      _
    $region23: #{tpu_custom_call.1} parent=1 // pred_check_branch
      %46 = sbr.rel (0) target = $region25
    $region24: #{tpu_custom_call.1} parent=1 // pred_region
      %s48 = ssub.s32 512, 512
      %49 = vsyncadd [#allocation6], %s48
      %s50 = sshll.u32 [#allocation7], 4
      %s51 = int_to_ptr.vmem [resolvable:$true] %s50
      %56 = dma.hbm_to_vmem [thread:$0]  %s5, 512, %s51, [#allocation6], 128, 128, 8
    $region25: #{tpu_custom_call.1} parent=1 // pred_fallthru
      _
    // Predicated region
    $region26: #{tpu_custom_call.1} parent=1 // pred_check
      _
    $region27: #{tpu_custom_call.1} parent=1 // pred_check_branch
      %58 = sbr.rel (0) target = $region29
    $region28: #{tpu_custom_call.1} parent=1 // pred_region
      _
    $region29: #{tpu_custom_call.1} parent=1 // pred_fallthru
      _
    // Predicated region
    $region30: #{tpu_custom_call.1} parent=1 // pred_check
      _
    $region31: #{tpu_custom_call.1} parent=1 // pred_check_branch
      %60 = sbr.rel (0) target = $region33
    $region32: #{tpu_custom_call.1} parent=1 // pred_region
      %61 = dma.done [#allocation3], 256
    $region33: #{tpu_custom_call.1} parent=1 // pred_fallthru
      _
    // Predicated region
    $region34: #{tpu_custom_call.1} parent=1 // pred_check
      _
    $region35: #{tpu_custom_call.1} parent=1 // pred_check_branch
      %63 = sbr.rel (0) target = $region37
    $region36: #{tpu_custom_call.1} parent=1 // pred_region
      %64 = dma.done [#allocation6], 512
    $region37: #{tpu_custom_call.1} parent=1 // pred_fallthru
      _
    // Predicated region
    $region38: #{tpu_custom_call.1} parent=1 // pred_check
      _
    $region39: #{tpu_custom_call.1} parent=1 // pred_check_branch
      %66 = sbr.rel (0) target = $region41
    $region40: #{tpu_custom_call.1} parent=1 // pred_region
      %67 = dma.done [#allocation6], 512
    $region41: #{tpu_custom_call.1} parent=1 // pred_fallthru
      _
    %v68 = vld [vmem:[#allocation2] sm:$0xff]
    %v69 = vld [vmem:[#allocation2 + $0x8] sm:$0xff]
    %vm70 = vcmask 261120
    %v71 = vsel %vm70, %v68, 0.0
    %72 = vadd.xlane.f32.xlu0 %v71
    %v73 = vpop.xlane.xlu0 %72
    %v74 = vsel %vm70, %v69, 0.0
    %75 = vadd.xlane.f32.xlu0 %v74
    %v76 = vpop.xlane.xlu0 %75
    %v77 = vrcp.pop 32.0
    %v78 = vmul.f32 %v73, %v77
    %v79 = vmul.f32 %v76, %v77
    %v80 = vsub.f32 %v68, %v78
    %v81 = vsub.f32 %v69, %v79
    %v82 = vmul.f32 %v80, %v80
    %v83 = vmul.f32 %v81, %v81
    %v84 = vsel %vm70, %v82, 0.0
    %85 = vadd.xlane.f32.xlu0 %v84
    %v86 = vpop.xlane.xlu0 %85
    %v87 = vsel %vm70, %v83, 0.0
    %88 = vadd.xlane.f32.xlu0 %v87
    %v89 = vpop.xlane.xlu0 %88
    %v90 = vmul.f32 %v86, %v77
    %v91 = vmul.f32 %v89, %v77
    %v92 = vadd.f32 %v90, 1e-05
    %v93 = vadd.f32 %v91, 1e-05
    %v94 = vrsqrt.pop %v92
    %v95 = vrsqrt.pop %v93
    %v96 = vmul.f32 %v80, %v94
    %v97 = vmul.f32 %v81, %v95
    %v98 = vld [vmem:[%s1] sm:$0x1]
    %v100 = vlaneseq
    %v101 = vshrl.u32 %v100, 7
    %v102 = vsub.s32 0, %v101
    %v103 = vrot.slane %v98, %v102
    %v105 = vmul.f32 %v96, %v103
    %v106 = vmul.f32 %v97, %v103
    %v107 = vld [vmem:[%s2] sm:$0x1]
    %v109 = vlaneseq
    %v110 = vshrl.u32 %v109, 7
    %v111 = vsub.s32 0, %v110
    %v112 = vrot.slane %v107, %v111
    %v114 = vadd.f32 %v105, %v112
    %v115 = vadd.f32 %v106, %v112
    %v116 = vld [vmem:[#allocation5] sm:$0xff]
    %v117 = vld [vmem:[#allocation5 + $0x8] sm:$0xff]
    %v118 = vld [vmem:[#allocation5 + $0x10] sm:$0xff]
    %v119 = vld [vmem:[#allocation5 + $0x18] sm:$0xff]
    %v120 = vld [vmem:[%s4] sm:$0x1]
    %v122 = vlaneseq
    %v123 = vshrl.u32 %v122, 7
    %v124 = vsub.s32 0, %v123
    %v125 = vrot.slane %v120, %v124
    %v128 = vsel %vm70, %v114, 0
    %v131 = vsel %vm70, %v115, 0
    %133 = vmatprep.subr.mxu0 0.0
    %134 = vmatpush1.msra.mxu0 %v116
    %135 = vmatprep.subr.mxu0 0.0
    %136 = vmatpush1.msra.mxu0 %v117
    %137 = vmatprep.subr.mxu0 0.0
    %138 = vmatpush1.msra.mxu0 %v118
    %139 = vmatprep.subr.mxu0 0.0
    %140 = vmatpush1.msra.mxu0 %v119
    %141 = vmatprep.subr.mxu0 0.0
    %142 = vmatpush1.msra.mxu0 0.0
    %143 = vmatprep.subr.mxu0 0.0
    %144 = vmatpush1.msra.mxu0 0.0
    %145 = vmatprep.subr.mxu0 0.0
    %146 = vmatpush1.msra.mxu0 0.0
    %147 = vmatprep.subr.mxu0 0.0
    %148 = vmatpush1.msra.mxu0 0.0
    %149 = vmatprep.subr.mxu0 0.0
    %150 = vmatpush1.msra.mxu0 0.0
    %151 = vmatprep.subr.mxu0 0.0
    %152 = vmatpush1.msra.mxu0 0.0
    %153 = vmatprep.subr.mxu0 0.0
    %154 = vmatpush1.msra.mxu0 0.0
    %155 = vmatprep.subr.mxu0 0.0
    %156 = vmatpush1.msra.mxu0 0.0
    %157 = vmatprep.subr.mxu0 0.0
    %158 = vmatpush1.msra.mxu0 0.0
    %159 = vmatprep.subr.mxu0 0.0
    %160 = vmatpush1.msra.mxu0 0.0
    %161 = vmatprep.subr.mxu0 0.0
    %162 = vmatpush1.msra.mxu0 0.0
    %163 = vmatprep.subr.mxu0 0.0
    %164 = vmatpush1.msra.mxu0 0.0
    %165 = vmatprep.subr.mxu0 0.0
    %166 = vmatpush1.msra.mxu0 0.0
    %167 = vmatprep.subr.mxu0 0.0
    %168 = vmatpush1.msra.mxu0 0.0
    %169 = vmatprep.subr.mxu0 0.0
    %170 = vmatpush1.msra.mxu0 0.0
    %171 = vmatprep.subr.mxu0 0.0
    %172 = vmatpush1.msra.mxu0 0.0
    %173 = vmatprep.subr.mxu0 0.0
    %174 = vmatpush1.msra.mxu0 0.0
    %175 = vmatprep.subr.mxu0 0.0
    %176 = vmatpush1.msra.mxu0 0.0
    %177 = vmatprep.subr.mxu0 0.0
    %178 = vmatpush1.msra.mxu0 0.0
    %179 = vmatprep.subr.mxu0 0.0
    %180 = vmatpush1.msra.mxu0 0.0
    %181 = vmatprep.subr.mxu0 0.0
    %182 = vmatpush1.msra.mxu0 0.0
    %183 = vmatprep.subr.mxu0 0.0
    %184 = vmatpush1.msra.mxu0 0.0
    %185 = vmatprep.subr.mxu0 0.0
    %186 = vmatpush1.msra.mxu0 0.0
    %187 = vmatprep.subr.mxu0 0.0
    %188 = vmatpush1.msra.mxu0 0.0
    %189 = vmatprep.subr.mxu0 0.0
    %190 = vmatpush1.msra.mxu0 0.0
    %191 = vmatprep.subr.mxu0 0.0
    %192 = vmatpush1.msra.mxu0 0.0
    %193 = vmatprep.subr.mxu0 0.0
    %194 = vmatpush1.msra.mxu0 0.0
    %195 = vmatprep.subr.mxu0 0.0
    %196 = vmatpush1.msra.mxu0 0.0
    %197 = vmatprep.mubr.f32.mxu0 0.0
    %198 = vmatmul.mubr.f32.gmra.mrb[0].mxu0 %v128
    %v199 = vpop.f32.mrb[0].mxu0
    %v200 = vadd.f32 %v125, %v199
    %v201 = vpop.f32.mrb[0].mxu0
    %202 = vmatprep.mubr.f32.mxu0 0.0
    %203 = vmatmul.mubr.f32.gmra.mrb[0].mxu0 %v131
    %v204 = vpop.f32.mrb[0].mxu0
    %v205 = vadd.f32 %v125, %v204
    %v206 = vpop.f32.mrb[0].mxu0
    %207 = vdwg.mxu0
    %v208 = vld [vmem:[%s6] sm:$0x1]
    %v210 = vlaneseq
    %v211 = vshrl.u32 %v210, 7
    %v212 = vsub.s32 0, %v211
    %v213 = vrot.slane %v208, %v212
    %v215 = vadd.f32 %v213, 0.0
    %217 = vrot.lane.b32.xlu0 %v200, 96
    %v218 = vpop.permute.xlu0 %217
    %vm219 = vcmask 64512
    %v220 = vsel %vm219, %v200, 0
    %v222 = vsel %vm219, %v218, 0
    %224 = vmatprep.subr.mxu0 0.0
    %225 = vmatpush1.xpose.msra.mxu0 %v222
    %226 = vmatprep.subr.mxu0 0.0
    %227 = vmatpush1.xpose.msra.mxu0 0.0
    %228 = vmatprep.subr.mxu0 0.0
    %229 = vmatpush1.xpose.msra.mxu0 0.0
    %230 = vmatprep.subr.mxu0 0.0
    %231 = vmatpush1.xpose.msra.mxu0 0.0
    %232 = vmatprep.subr.mxu0 0.0
    %233 = vmatpush1.xpose.msra.mxu0 0.0
    %234 = vmatprep.subr.mxu0 0.0
    %235 = vmatpush1.xpose.msra.mxu0 0.0
    %236 = vmatprep.subr.mxu0 0.0
    %237 = vmatpush1.xpose.msra.mxu0 0.0
    %238 = vmatprep.subr.mxu0 0.0
    %239 = vmatpush1.xpose.msra.mxu0 0.0
    %240 = vmatprep.subr.mxu0 0.0
    %241 = vmatpush1.xpose.msra.mxu0 0.0
    %242 = vmatprep.subr.mxu0 0.0
    %243 = vmatpush1.xpose.msra.mxu0 0.0
    %244 = vmatprep.subr.mxu0 0.0
    %245 = vmatpush1.xpose.msra.mxu0 0.0
    %246 = vmatprep.subr.mxu0 0.0
    %247 = vmatpush1.xpose.msra.mxu0 0.0
    %248 = vmatprep.subr.mxu0 0.0
    %249 = vmatpush1.xpose.msra.mxu0 0.0
    %250 = vmatprep.subr.mxu0 0.0
    %251 = vmatpush1.xpose.msra.mxu0 0.0
    %252 = vmatprep.subr.mxu0 0.0
    %253 = vmatpush1.xpose.msra.mxu0 0.0
    %254 = vmatprep.subr.mxu0 0.0
    %255 = vmatpush1.xpose.msra.mxu0 0.0
    %256 = vmatprep.subr.mxu0 0.0
    %257 = vmatpush1.xpose.msra.mxu0 0.0
    %258 = vmatprep.subr.mxu0 0.0
    %259 = vmatpush1.xpose.msra.mxu0 0.0
    %260 = vmatprep.subr.mxu0 0.0
    %261 = vmatpush1.xpose.msra.mxu0 0.0
    %262 = vmatprep.subr.mxu0 0.0
    %263 = vmatpush1.xpose.msra.mxu0 0.0
    %264 = vmatprep.subr.mxu0 0.0
    %265 = vmatpush1.xpose.msra.mxu0 0.0
    %266 = vmatprep.subr.mxu0 0.0
    %267 = vmatpush1.xpose.msra.mxu0 0.0
    %268 = vmatprep.subr.mxu0 0.0
    %269 = vmatpush1.xpose.msra.mxu0 0.0
    %270 = vmatprep.subr.mxu0 0.0
    %271 = vmatpush1.xpose.msra.mxu0 0.0
    %272 = vmatprep.subr.mxu0 0.0
    %273 = vmatpush1.xpose.msra.mxu0 0.0
    %274 = vmatprep.subr.mxu0 0.0
    %275 = vmatpush1.xpose.msra.mxu0 0.0
    %276 = vmatprep.subr.mxu0 0.0
    %277 = vmatpush1.xpose.msra.mxu0 0.0
    %278 = vmatprep.subr.mxu0 0.0
    %279 = vmatpush1.xpose.msra.mxu0 0.0
    %280 = vmatprep.subr.mxu0 0.0
    %281 = vmatpush1.xpose.msra.mxu0 0.0
    %282 = vmatprep.subr.mxu0 0.0
    %283 = vmatpush1.xpose.msra.mxu0 0.0
    %284 = vmatprep.subr.mxu0 0.0
    %285 = vmatpush1.xpose.msra.mxu0 0.0
    %286 = vmatprep.subr.mxu0 0.0
    %287 = vmatpush1.xpose.msra.mxu0 0.0
    %288 = vmatprep.mubr.f32.mxu0 0.0
    %289 = vmatmul.mubr.f32.gmra.mrb[0].mxu0 %v220
    %v290 = vpop.f32.mrb[0].mxu0
    %v291 = vadd.f32 0.0, %v290
    %v292 = vpop.f32.mrb[0].mxu0
    %293 = vdwg.mxu0
    %295 = vrot.lane.b32.xlu0 %v205, 96
    %v296 = vpop.permute.xlu0 %295
    %v297 = vsel %vm219, %v205, 0
    %v299 = vsel %vm219, %v296, 0
    %301 = vmatprep.subr.mxu0 0.0
    %302 = vmatpush1.xpose.msra.mxu0 %v299
    %303 = vmatprep.subr.mxu0 0.0
    %304 = vmatpush1.xpose.msra.mxu0 0.0
    %305 = vmatprep.subr.mxu0 0.0
    %306 = vmatpush1.xpose.msra.mxu0 0.0
    %307 = vmatprep.subr.mxu0 0.0
    %308 = vmatpush1.xpose.msra.mxu0 0.0
    %309 = vmatprep.subr.mxu0 0.0
    %310 = vmatpush1.xpose.msra.mxu0 0.0
    %311 = vmatprep.subr.mxu0 0.0
    %312 = vmatpush1.xpose.msra.mxu0 0.0
    %313 = vmatprep.subr.mxu0 0.0
    %314 = vmatpush1.xpose.msra.mxu0 0.0
    %315 = vmatprep.subr.mxu0 0.0
    %316 = vmatpush1.xpose.msra.mxu0 0.0
    %317 = vmatprep.subr.mxu0 0.0
    %318 = vmatpush1.xpose.msra.mxu0 0.0
    %319 = vmatprep.subr.mxu0 0.0
    %320 = vmatpush1.xpose.msra.mxu0 0.0
    %321 = vmatprep.subr.mxu0 0.0
    %322 = vmatpush1.xpose.msra.mxu0 0.0
    %323 = vmatprep.subr.mxu0 0.0
    %324 = vmatpush1.xpose.msra.mxu0 0.0
    %325 = vmatprep.subr.mxu0 0.0
    %326 = vmatpush1.xpose.msra.mxu0 0.0
    %327 = vmatprep.subr.mxu0 0.0
    %328 = vmatpush1.xpose.msra.mxu0 0.0
    %329 = vmatprep.subr.mxu0 0.0
    %330 = vmatpush1.xpose.msra.mxu0 0.0
    %331 = vmatprep.subr.mxu0 0.0
    %332 = vmatpush1.xpose.msra.mxu0 0.0
    %333 = vmatprep.subr.mxu0 0.0
    %334 = vmatpush1.xpose.msra.mxu0 0.0
    %335 = vmatprep.subr.mxu0 0.0
    %336 = vmatpush1.xpose.msra.mxu0 0.0
    %337 = vmatprep.subr.mxu0 0.0
    %338 = vmatpush1.xpose.msra.mxu0 0.0
    %339 = vmatprep.subr.mxu0 0.0
    %340 = vmatpush1.xpose.msra.mxu0 0.0
    %341 = vmatprep.subr.mxu0 0.0
    %342 = vmatpush1.xpose.msra.mxu0 0.0
    %343 = vmatprep.subr.mxu0 0.0
    %344 = vmatpush1.xpose.msra.mxu0 0.0
    %345 = vmatprep.subr.mxu0 0.0
    %346 = vmatpush1.xpose.msra.mxu0 0.0
    %347 = vmatprep.subr.mxu0 0.0
    %348 = vmatpush1.xpose.msra.mxu0 0.0
    %349 = vmatprep.subr.mxu0 0.0
    %350 = vmatpush1.xpose.msra.mxu0 0.0
    %351 = vmatprep.subr.mxu0 0.0
    %352 = vmatpush1.xpose.msra.mxu0 0.0
    %353 = vmatprep.subr.mxu0 0.0
    %354 = vmatpush1.xpose.msra.mxu0 0.0
    %355 = vmatprep.subr.mxu0 0.0
    %356 = vmatpush1.xpose.msra.mxu0 0.0
    %357 = vmatprep.subr.mxu0 0.0
    %358 = vmatpush1.xpose.msra.mxu0 0.0
    %359 = vmatprep.subr.mxu0 0.0
    %360 = vmatpush1.xpose.msra.mxu0 0.0
    %361 = vmatprep.subr.mxu0 0.0
    %362 = vmatpush1.xpose.msra.mxu0 0.0
    %363 = vmatprep.subr.mxu0 0.0
    %364 = vmatpush1.xpose.msra.mxu0 0.0
    %365 = vmatprep.mubr.f32.mxu0 0.0
    %366 = vmatmul.mubr.f32.gmra.mrb[0].mxu0 %v297
    %v367 = vpop.f32.mrb[0].mxu0
    %v368 = vadd.f32 0.0, %v367
    %v369 = vpop.f32.mrb[0].mxu0
    %370 = vdwg.mxu0
    %v371 = vsel %vm219, %v291, -inf
    %372 = vmax.xlane.f32.xlu0 %v371
    %v373 = vpop.xlane.xlu0 %372
    %v374 = vsel %vm219, %v368, -inf
    %375 = vmax.xlane.f32.xlu0 %v374
    %v376 = vpop.xlane.xlu0 %375
    %v377 = vsub.f32 %v291, %v373
    %v378 = vsub.f32 %v368, %v376
    %v379 = vmul.f32 %v377, 1.442695
    %v380 = vpow.pop %v379
    %v381 = vmul.f32 %v378, 1.442695
    %v382 = vpow.pop %v381
    %v383 = vsel %vm219, %v380, 0.0
    %384 = vadd.xlane.f32.xlu0 %v383
    %v385 = vpop.xlane.xlu0 %384
    %v386 = vsel %vm219, %v382, 0.0
    %387 = vadd.xlane.f32.xlu0 %v386
    %v388 = vpop.xlane.xlu0 %387
    %v389 = vrcp.pop %v385
    %v390 = vrcp.pop %v388
    %v391 = vmul.f32 %v380, %v389
    %v392 = vmul.f32 %v382, %v390
    %393 = vrot.lane.b32.xlu0 %v200, 64
    %v394 = vpop.permute.xlu0 %393
    %v397 = vsel %vm219, %v391, 0
    %399 = vmatprep.subr.mxu0 0.0
    %400 = vmatpush1.msra.mxu0 %v394
    %401 = vmatprep.subr.mxu0 0.0
    %402 = vmatpush1.msra.mxu0 0.0
    %403 = vmatprep.subr.mxu0 0.0
    %404 = vmatpush1.msra.mxu0 0.0
    %405 = vmatprep.subr.mxu0 0.0
    %406 = vmatpush1.msra.mxu0 0.0
    %407 = vmatprep.subr.mxu0 0.0
    %408 = vmatpush1.msra.mxu0 0.0
    %409 = vmatprep.subr.mxu0 0.0
    %410 = vmatpush1.msra.mxu0 0.0
    %411 = vmatprep.subr.mxu0 0.0
    %412 = vmatpush1.msra.mxu0 0.0
    %413 = vmatprep.subr.mxu0 0.0
    %414 = vmatpush1.msra.mxu0 0.0
    %415 = vmatprep.subr.mxu0 0.0
    %416 = vmatpush1.msra.mxu0 0.0
    %417 = vmatprep.subr.mxu0 0.0
    %418 = vmatpush1.msra.mxu0 0.0
    %419 = vmatprep.subr.mxu0 0.0
    %420 = vmatpush1.msra.mxu0 0.0
    %421 = vmatprep.subr.mxu0 0.0
    %422 = vmatpush1.msra.mxu0 0.0
    %423 = vmatprep.subr.mxu0 0.0
    %424 = vmatpush1.msra.mxu0 0.0
    %425 = vmatprep.subr.mxu0 0.0
    %426 = vmatpush1.msra.mxu0 0.0
    %427 = vmatprep.subr.mxu0 0.0
    %428 = vmatpush1.msra.mxu0 0.0
    %429 = vmatprep.subr.mxu0 0.0
    %430 = vmatpush1.msra.mxu0 0.0
    %431 = vmatprep.subr.mxu0 0.0
    %432 = vmatpush1.msra.mxu0 0.0
    %433 = vmatprep.subr.mxu0 0.0
    %434 = vmatpush1.msra.mxu0 0.0
    %435 = vmatprep.subr.mxu0 0.0
    %436 = vmatpush1.msra.mxu0 0.0
    %437 = vmatprep.subr.mxu0 0.0
    %438 = vmatpush1.msra.mxu0 0.0
    %439 = vmatprep.subr.mxu0 0.0
    %440 = vmatpush1.msra.mxu0 0.0
    %441 = vmatprep.subr.mxu0 0.0
    %442 = vmatpush1.msra.mxu0 0.0
    %443 = vmatprep.subr.mxu0 0.0
    %444 = vmatpush1.msra.mxu0 0.0
    %445 = vmatprep.subr.mxu0 0.0
    %446 = vmatpush1.msra.mxu0 0.0
    %447 = vmatprep.subr.mxu0 0.0
    %448 = vmatpush1.msra.mxu0 0.0
    %449 = vmatprep.subr.mxu0 0.0
    %450 = vmatpush1.msra.mxu0 0.0
    %451 = vmatprep.subr.mxu0 0.0
    %452 = vmatpush1.msra.mxu0 0.0
    %453 = vmatprep.subr.mxu0 0.0
    %454 = vmatpush1.msra.mxu0 0.0
    %455 = vmatprep.subr.mxu0 0.0
    %456 = vmatpush1.msra.mxu0 0.0
    %457 = vmatprep.subr.mxu0 0.0
    %458 = vmatpush1.msra.mxu0 0.0
    %459 = vmatprep.subr.mxu0 0.0
    %460 = vmatpush1.msra.mxu0 0.0
    %461 = vmatprep.subr.mxu0 0.0
    %462 = vmatpush1.msra.mxu0 0.0
    %463 = vmatprep.mubr.f32.mxu0 0.0
    %464 = vmatmul.mubr.f32.gmra.mrb[0].mxu0 %v397
    %v465 = vpop.f32.mrb[0].mxu0
    %v466 = vadd.f32 0.0, %v465
    %v467 = vpop.f32.mrb[0].mxu0
    %468 = vdwg.mxu0
    %469 = vrot.lane.b32.xlu0 %v205, 64
    %v470 = vpop.permute.xlu0 %469
    %v473 = vsel %vm219, %v392, 0
    %475 = vmatprep.subr.mxu0 0.0
    %476 = vmatpush1.msra.mxu0 %v470
    %477 = vmatprep.subr.mxu0 0.0
    %478 = vmatpush1.msra.mxu0 0.0
    %479 = vmatprep.subr.mxu0 0.0
    %480 = vmatpush1.msra.mxu0 0.0
    %481 = vmatprep.subr.mxu0 0.0
    %482 = vmatpush1.msra.mxu0 0.0
    %483 = vmatprep.subr.mxu0 0.0
    %484 = vmatpush1.msra.mxu0 0.0
    %485 = vmatprep.subr.mxu0 0.0
    %486 = vmatpush1.msra.mxu0 0.0
    %487 = vmatprep.subr.mxu0 0.0
    %488 = vmatpush1.msra.mxu0 0.0
    %489 = vmatprep.subr.mxu0 0.0
    %490 = vmatpush1.msra.mxu0 0.0
    %491 = vmatprep.subr.mxu0 0.0
    %492 = vmatpush1.msra.mxu0 0.0
    %493 = vmatprep.subr.mxu0 0.0
    %494 = vmatpush1.msra.mxu0 0.0
    %495 = vmatprep.subr.mxu0 0.0
    %496 = vmatpush1.msra.mxu0 0.0
    %497 = vmatprep.subr.mxu0 0.0
    %498 = vmatpush1.msra.mxu0 0.0
    %499 = vmatprep.subr.mxu0 0.0
    %500 = vmatpush1.msra.mxu0 0.0
    %501 = vmatprep.subr.mxu0 0.0
    %502 = vmatpush1.msra.mxu0 0.0
    %503 = vmatprep.subr.mxu0 0.0
    %504 = vmatpush1.msra.mxu0 0.0
    %505 = vmatprep.subr.mxu0 0.0
    %506 = vmatpush1.msra.mxu0 0.0
    %507 = vmatprep.subr.mxu0 0.0
    %508 = vmatpush1.msra.mxu0 0.0
    %509 = vmatprep.subr.mxu0 0.0
    %510 = vmatpush1.msra.mxu0 0.0
    %511 = vmatprep.subr.mxu0 0.0
    %512 = vmatpush1.msra.mxu0 0.0
    %513 = vmatprep.subr.mxu0 0.0
    %514 = vmatpush1.msra.mxu0 0.0
    %515 = vmatprep.subr.mxu0 0.0
    %516 = vmatpush1.msra.mxu0 0.0
    %517 = vmatprep.subr.mxu0 0.0
    %518 = vmatpush1.msra.mxu0 0.0
    %519 = vmatprep.subr.mxu0 0.0
    %520 = vmatpush1.msra.mxu0 0.0
    %521 = vmatprep.subr.mxu0 0.0
    %522 = vmatpush1.msra.mxu0 0.0
    %523 = vmatprep.subr.mxu0 0.0
    %524 = vmatpush1.msra.mxu0 0.0
    %525 = vmatprep.subr.mxu0 0.0
    %526 = vmatpush1.msra.mxu0 0.0
    %527 = vmatprep.subr.mxu0 0.0
    %528 = vmatpush1.msra.mxu0 0.0
    %529 = vmatprep.subr.mxu0 0.0
    %530 = vmatpush1.msra.mxu0 0.0
    %531 = vmatprep.subr.mxu0 0.0
    %532 = vmatpush1.msra.mxu0 0.0
    %533 = vmatprep.subr.mxu0 0.0
    %534 = vmatpush1.msra.mxu0 0.0
    %535 = vmatprep.subr.mxu0 0.0
    %536 = vmatpush1.msra.mxu0 0.0
    %537 = vmatprep.subr.mxu0 0.0
    %538 = vmatpush1.msra.mxu0 0.0
    %539 = vmatprep.mubr.f32.mxu0 0.0
    %540 = vmatmul.mubr.f32.gmra.mrb[0].mxu0 %v473
    %v541 = vpop.f32.mrb[0].mxu0
    %v542 = vadd.f32 0.0, %v541
    %v543 = vpop.f32.mrb[0].mxu0
    %544 = vdwg.mxu0
    %v545 = vld [vmem:[#allocation7] sm:$0xff]
    %v547 = vsel %vm219, %v466, 0
    %v550 = vsel %vm219, %v542, 0
    %552 = vmatprep.subr.mxu0 0.0
    %553 = vmatpush1.msra.mxu0 %v545
    %554 = vmatprep.subr.mxu0 0.0
    %555 = vmatpush1.msra.mxu0 0.0
    %556 = vmatprep.subr.mxu0 0.0
    %557 = vmatpush1.msra.mxu0 0.0
    %558 = vmatprep.subr.mxu0 0.0
    %559 = vmatpush1.msra.mxu0 0.0
    %560 = vmatprep.subr.mxu0 0.0
    %561 = vmatpush1.msra.mxu0 0.0
    %562 = vmatprep.subr.mxu0 0.0
    %563 = vmatpush1.msra.mxu0 0.0
    %564 = vmatprep.subr.mxu0 0.0
    %565 = vmatpush1.msra.mxu0 0.0
    %566 = vmatprep.subr.mxu0 0.0
    %567 = vmatpush1.msra.mxu0 0.0
    %568 = vmatprep.subr.mxu0 0.0
    %569 = vmatpush1.msra.mxu0 0.0
    %570 = vmatprep.subr.mxu0 0.0
    %571 = vmatpush1.msra.mxu0 0.0
    %572 = vmatprep.subr.mxu0 0.0
    %573 = vmatpush1.msra.mxu0 0.0
    %574 = vmatprep.subr.mxu0 0.0
    %575 = vmatpush1.msra.mxu0 0.0
    %576 = vmatprep.subr.mxu0 0.0
    %577 = vmatpush1.msra.mxu0 0.0
    %578 = vmatprep.subr.mxu0 0.0
    %579 = vmatpush1.msra.mxu0 0.0
    %580 = vmatprep.subr.mxu0 0.0
    %581 = vmatpush1.msra.mxu0 0.0
    %582 = vmatprep.subr.mxu0 0.0
    %583 = vmatpush1.msra.mxu0 0.0
    %584 = vmatprep.subr.mxu0 0.0
    %585 = vmatpush1.msra.mxu0 0.0
    %586 = vmatprep.subr.mxu0 0.0
    %587 = vmatpush1.msra.mxu0 0.0
    %588 = vmatprep.subr.mxu0 0.0
    %589 = vmatpush1.msra.mxu0 0.0
    %590 = vmatprep.subr.mxu0 0.0
    %591 = vmatpush1.msra.mxu0 0.0
    %592 = vmatprep.subr.mxu0 0.0
    %593 = vmatpush1.msra.mxu0 0.0
    %594 = vmatprep.subr.mxu0 0.0
    %595 = vmatpush1.msra.mxu0 0.0
    %596 = vmatprep.subr.mxu0 0.0
    %597 = vmatpush1.msra.mxu0 0.0
    %598 = vmatprep.subr.mxu0 0.0
    %599 = vmatpush1.msra.mxu0 0.0
    %600 = vmatprep.subr.mxu0 0.0
    %601 = vmatpush1.msra.mxu0 0.0
    %602 = vmatprep.subr.mxu0 0.0
    %603 = vmatpush1.msra.mxu0 0.0
    %604 = vmatprep.subr.mxu0 0.0
    %605 = vmatpush1.msra.mxu0 0.0
    %606 = vmatprep.subr.mxu0 0.0
    %607 = vmatpush1.msra.mxu0 0.0
    %608 = vmatprep.subr.mxu0 0.0
    %609 = vmatpush1.msra.mxu0 0.0
    %610 = vmatprep.subr.mxu0 0.0
    %611 = vmatpush1.msra.mxu0 0.0
    %612 = vmatprep.subr.mxu0 0.0
    %613 = vmatpush1.msra.mxu0 0.0
    %614 = vmatprep.subr.mxu0 0.0
    %615 = vmatpush1.msra.mxu0 0.0
    %616 = vmatprep.mubr.f32.mxu0 0.0
    %617 = vmatmul.mubr.f32.gmra.mrb[0].mxu0 %v547
    %v618 = vpop.f32.mrb[0].mxu0
    %v619 = vadd.f32 0.0, %v618
    %v620 = vpop.f32.mrb[0].mxu0
    %621 = vmatprep.mubr.f32.mxu0 0.0
    %622 = vmatmul.mubr.f32.gmra.mrb[0].mxu0 %v550
    %v623 = vpop.f32.mrb[0].mxu0
    %v624 = vadd.f32 0.0, %v623
    %v625 = vpop.f32.mrb[0].mxu0
    %626 = vdwg.mxu0
    %v627 = vadd.f32 %v215, %v619
    %v628 = vadd.f32 %v215, %v624
    %629 = vrot.lane.b32.xlu0 %v200, 120
    %v630 = vpop.permute.xlu0 %629
    %631 = vrot.lane.b32.xlu0 %v200, 88
    %v632 = vpop.permute.xlu0 %631
    %v633 = vsel %vm219, %v630, 0
    %v635 = vsel %vm219, %v632, 0
    %637 = vmatprep.subr.mxu0 0.0
    %638 = vmatpush1.xpose.msra.mxu0 %v635
    %639 = vmatprep.subr.mxu0 0.0
    %640 = vmatpush1.xpose.msra.mxu0 0.0
    %641 = vmatprep.subr.mxu0 0.0
    %642 = vmatpush1.xpose.msra.mxu0 0.0
    %643 = vmatprep.subr.mxu0 0.0
    %644 = vmatpush1.xpose.msra.mxu0 0.0
    %645 = vmatprep.subr.mxu0 0.0
    %646 = vmatpush1.xpose.msra.mxu0 0.0
    %647 = vmatprep.subr.mxu0 0.0
    %648 = vmatpush1.xpose.msra.mxu0 0.0
    %649 = vmatprep.subr.mxu0 0.0
    %650 = vmatpush1.xpose.msra.mxu0 0.0
    %651 = vmatprep.subr.mxu0 0.0
    %652 = vmatpush1.xpose.msra.mxu0 0.0
    %653 = vmatprep.subr.mxu0 0.0
    %654 = vmatpush1.xpose.msra.mxu0 0.0
    %655 = vmatprep.subr.mxu0 0.0
    %656 = vmatpush1.xpose.msra.mxu0 0.0
    %657 = vmatprep.subr.mxu0 0.0
    %658 = vmatpush1.xpose.msra.mxu0 0.0
    %659 = vmatprep.subr.mxu0 0.0
    %660 = vmatpush1.xpose.msra.mxu0 0.0
    %661 = vmatprep.subr.mxu0 0.0
    %662 = vmatpush1.xpose.msra.mxu0 0.0
    %663 = vmatprep.subr.mxu0 0.0
    %664 = vmatpush1.xpose.msra.mxu0 0.0
    %665 = vmatprep.subr.mxu0 0.0
    %666 = vmatpush1.xpose.msra.mxu0 0.0
    %667 = vmatprep.subr.mxu0 0.0
    %668 = vmatpush1.xpose.msra.mxu0 0.0
    %669 = vmatprep.subr.mxu0 0.0
    %670 = vmatpush1.xpose.msra.mxu0 0.0
    %671 = vmatprep.subr.mxu0 0.0
    %672 = vmatpush1.xpose.msra.mxu0 0.0
    %673 = vmatprep.subr.mxu0 0.0
    %674 = vmatpush1.xpose.msra.mxu0 0.0
    %675 = vmatprep.subr.mxu0 0.0
    %676 = vmatpush1.xpose.msra.mxu0 0.0
    %677 = vmatprep.subr.mxu0 0.0
    %678 = vmatpush1.xpose.msra.mxu0 0.0
    %679 = vmatprep.subr.mxu0 0.0
    %680 = vmatpush1.xpose.msra.mxu0 0.0
    %681 = vmatprep.subr.mxu0 0.0
    %682 = vmatpush1.xpose.msra.mxu0 0.0
    %683 = vmatprep.subr.mxu0 0.0
    %684 = vmatpush1.xpose.msra.mxu0 0.0
    %685 = vmatprep.subr.mxu0 0.0
    %686 = vmatpush1.xpose.msra.mxu0 0.0
    %687 = vmatprep.subr.mxu0 0.0
    %688 = vmatpush1.xpose.msra.mxu0 0.0
    %689 = vmatprep.subr.mxu0 0.0
    %690 = vmatpush1.xpose.msra.mxu0 0.0
    %691 = vmatprep.subr.mxu0 0.0
    %692 = vmatpush1.xpose.msra.mxu0 0.0
    %693 = vmatprep.subr.mxu0 0.0
    %694 = vmatpush1.xpose.msra.mxu0 0.0
    %695 = vmatprep.subr.mxu0 0.0
    %696 = vmatpush1.xpose.msra.mxu0 0.0
    %697 = vmatprep.subr.mxu0 0.0
    %698 = vmatpush1.xpose.msra.mxu0 0.0
    %699 = vmatprep.subr.mxu0 0.0
    %700 = vmatpush1.xpose.msra.mxu0 0.0
    %701 = vmatprep.mubr.f32.mxu0 0.0
    %702 = vmatmul.mubr.f32.gmra.mrb[0].mxu0 %v633
    %v703 = vpop.f32.mrb[0].mxu0
    %v704 = vadd.f32 0.0, %v703
    %v705 = vpop.f32.mrb[0].mxu0
    %706 = vdwg.mxu0
    %707 = vrot.lane.b32.xlu0 %v205, 120
    %v708 = vpop.permute.xlu0 %707
    %709 = vrot.lane.b32.xlu0 %v205, 88
    %v710 = vpop.permute.xlu0 %709
    %v711 = vsel %vm219, %v708, 0
    %v713 = vsel %vm219, %v710, 0
    %715 = vmatprep.subr.mxu0 0.0
    %716 = vmatpush1.xpose.msra.mxu0 %v713
    %717 = vmatprep.subr.mxu0 0.0
    %718 = vmatpush1.xpose.msra.mxu0 0.0
    %719 = vmatprep.subr.mxu0 0.0
    %720 = vmatpush1.xpose.msra.mxu0 0.0
    %721 = vmatprep.subr.mxu0 0.0
    %722 = vmatpush1.xpose.msra.mxu0 0.0
    %723 = vmatprep.subr.mxu0 0.0
    %724 = vmatpush1.xpose.msra.mxu0 0.0
    %725 = vmatprep.subr.mxu0 0.0
    %726 = vmatpush1.xpose.msra.mxu0 0.0
    %727 = vmatprep.subr.mxu0 0.0
    %728 = vmatpush1.xpose.msra.mxu0 0.0
    %729 = vmatprep.subr.mxu0 0.0
    %730 = vmatpush1.xpose.msra.mxu0 0.0
    %731 = vmatprep.subr.mxu0 0.0
    %732 = vmatpush1.xpose.msra.mxu0 0.0
    %733 = vmatprep.subr.mxu0 0.0
    %734 = vmatpush1.xpose.msra.mxu0 0.0
    %735 = vmatprep.subr.mxu0 0.0
    %736 = vmatpush1.xpose.msra.mxu0 0.0
    %737 = vmatprep.subr.mxu0 0.0
    %738 = vmatpush1.xpose.msra.mxu0 0.0
    %739 = vmatprep.subr.mxu0 0.0
    %740 = vmatpush1.xpose.msra.mxu0 0.0
    %741 = vmatprep.subr.mxu0 0.0
    %742 = vmatpush1.xpose.msra.mxu0 0.0
    %743 = vmatprep.subr.mxu0 0.0
    %744 = vmatpush1.xpose.msra.mxu0 0.0
    %745 = vmatprep.subr.mxu0 0.0
    %746 = vmatpush1.xpose.msra.mxu0 0.0
    %747 = vmatprep.subr.mxu0 0.0
    %748 = vmatpush1.xpose.msra.mxu0 0.0
    %749 = vmatprep.subr.mxu0 0.0
    %750 = vmatpush1.xpose.msra.mxu0 0.0
    %751 = vmatprep.subr.mxu0 0.0
    %752 = vmatpush1.xpose.msra.mxu0 0.0
    %753 = vmatprep.subr.mxu0 0.0
    %754 = vmatpush1.xpose.msra.mxu0 0.0
    %755 = vmatprep.subr.mxu0 0.0
    %756 = vmatpush1.xpose.msra.mxu0 0.0
    %757 = vmatprep.subr.mxu0 0.0
    %758 = vmatpush1.xpose.msra.mxu0 0.0
    %759 = vmatprep.subr.mxu0 0.0
    %760 = vmatpush1.xpose.msra.mxu0 0.0
    %761 = vmatprep.subr.mxu0 0.0
    %762 = vmatpush1.xpose.msra.mxu0 0.0
    %763 = vmatprep.subr.mxu0 0.0
    %764 = vmatpush1.xpose.msra.mxu0 0.0
    %765 = vmatprep.subr.mxu0 0.0
    %766 = vmatpush1.xpose.msra.mxu0 0.0
    %767 = vmatprep.subr.mxu0 0.0
    %768 = vmatpush1.xpose.msra.mxu0 0.0
    %769 = vmatprep.subr.mxu0 0.0
    %770 = vmatpush1.xpose.msra.mxu0 0.0
    %771 = vmatprep.subr.mxu0 0.0
    %772 = vmatpush1.xpose.msra.mxu0 0.0
    %773 = vmatprep.subr.mxu0 0.0
    %774 = vmatpush1.xpose.msra.mxu0 0.0
    %775 = vmatprep.subr.mxu0 0.0
    %776 = vmatpush1.xpose.msra.mxu0 0.0
    %777 = vmatprep.subr.mxu0 0.0
    %778 = vmatpush1.xpose.msra.mxu0 0.0
    %779 = vmatprep.mubr.f32.mxu0 0.0
    %780 = vmatmul.mubr.f32.gmra.mrb[0].mxu0 %v711
    %v781 = vpop.f32.mrb[0].mxu0
    %v782 = vadd.f32 0.0, %v781
    %v783 = vpop.f32.mrb[0].mxu0
    %784 = vdwg.mxu0
    %v785 = vsel %vm219, %v704, -inf
    %786 = vmax.xlane.f32.xlu0 %v785
    %v787 = vpop.xlane.xlu0 %786
    %v788 = vsel %vm219, %v782, -inf
    %789 = vmax.xlane.f32.xlu0 %v788
    %v790 = vpop.xlane.xlu0 %789
    %v791 = vsub.f32 %v704, %v787
    %v792 = vsub.f32 %v782, %v790
    %v793 = vmul.f32 %v791, 1.442695
    %v794 = vpow.pop %v793
    %v795 = vmul.f32 %v792, 1.442695
    %v796 = vpow.pop %v795
    %v797 = vsel %vm219, %v794, 0.0
    %798 = vadd.xlane.f32.xlu0 %v797
    %v799 = vpop.xlane.xlu0 %798
    %v800 = vsel %vm219, %v796, 0.0
    %801 = vadd.xlane.f32.xlu0 %v800
    %v802 = vpop.xlane.xlu0 %801
    %v803 = vrcp.pop %v799
    %v804 = vrcp.pop %v802
    %v805 = vmul.f32 %v794, %v803
    %v806 = vmul.f32 %v796, %v804
    %807 = vrot.lane.b32.xlu0 %v200, 56
    %v808 = vpop.permute.xlu0 %807
    %v811 = vsel %vm219, %v805, 0
    %813 = vmatprep.subr.mxu0 0.0
    %814 = vmatpush1.msra.mxu0 %v808
    %815 = vmatprep.subr.mxu0 0.0
    %816 = vmatpush1.msra.mxu0 0.0
    %817 = vmatprep.subr.mxu0 0.0
    %818 = vmatpush1.msra.mxu0 0.0
    %819 = vmatprep.subr.mxu0 0.0
    %820 = vmatpush1.msra.mxu0 0.0
    %821 = vmatprep.subr.mxu0 0.0
    %822 = vmatpush1.msra.mxu0 0.0
    %823 = vmatprep.subr.mxu0 0.0
    %824 = vmatpush1.msra.mxu0 0.0
    %825 = vmatprep.subr.mxu0 0.0
    %826 = vmatpush1.msra.mxu0 0.0
    %827 = vmatprep.subr.mxu0 0.0
    %828 = vmatpush1.msra.mxu0 0.0
    %829 = vmatprep.subr.mxu0 0.0
    %830 = vmatpush1.msra.mxu0 0.0
    %831 = vmatprep.subr.mxu0 0.0
    %832 = vmatpush1.msra.mxu0 0.0
    %833 = vmatprep.subr.mxu0 0.0
    %834 = vmatpush1.msra.mxu0 0.0
    %835 = vmatprep.subr.mxu0 0.0
    %836 = vmatpush1.msra.mxu0 0.0
    %837 = vmatprep.subr.mxu0 0.0
    %838 = vmatpush1.msra.mxu0 0.0
    %839 = vmatprep.subr.mxu0 0.0
    %840 = vmatpush1.msra.mxu0 0.0
    %841 = vmatprep.subr.mxu0 0.0
    %842 = vmatpush1.msra.mxu0 0.0
    %843 = vmatprep.subr.mxu0 0.0
    %844 = vmatpush1.msra.mxu0 0.0
    %845 = vmatprep.subr.mxu0 0.0
    %846 = vmatpush1.msra.mxu0 0.0
    %847 = vmatprep.subr.mxu0 0.0
    %848 = vmatpush1.msra.mxu0 0.0
    %849 = vmatprep.subr.mxu0 0.0
    %850 = vmatpush1.msra.mxu0 0.0
    %851 = vmatprep.subr.mxu0 0.0
    %852 = vmatpush1.msra.mxu0 0.0
    %853 = vmatprep.subr.mxu0 0.0
    %854 = vmatpush1.msra.mxu0 0.0
    %855 = vmatprep.subr.mxu0 0.0
    %856 = vmatpush1.msra.mxu0 0.0
    %857 = vmatprep.subr.mxu0 0.0
    %858 = vmatpush1.msra.mxu0 0.0
    %859 = vmatprep.subr.mxu0 0.0
    %860 = vmatpush1.msra.mxu0 0.0
    %861 = vmatprep.subr.mxu0 0.0
    %862 = vmatpush1.msra.mxu0 0.0
    %863 = vmatprep.subr.mxu0 0.0
    %864 = vmatpush1.msra.mxu0 0.0
    %865 = vmatprep.subr.mxu0 0.0
    %866 = vmatpush1.msra.mxu0 0.0
    %867 = vmatprep.subr.mxu0 0.0
    %868 = vmatpush1.msra.mxu0 0.0
    %869 = vmatprep.subr.mxu0 0.0
    %870 = vmatpush1.msra.mxu0 0.0
    %871 = vmatprep.subr.mxu0 0.0
    %872 = vmatpush1.msra.mxu0 0.0
    %873 = vmatprep.subr.mxu0 0.0
    %874 = vmatpush1.msra.mxu0 0.0
    %875 = vmatprep.subr.mxu0 0.0
    %876 = vmatpush1.msra.mxu0 0.0
    %877 = vmatprep.mubr.f32.mxu0 0.0
    %878 = vmatmul.mubr.f32.gmra.mrb[0].mxu0 %v811
    %v879 = vpop.f32.mrb[0].mxu0
    %v880 = vadd.f32 0.0, %v879
    %v881 = vpop.f32.mrb[0].mxu0
    %882 = vdwg.mxu0
    %883 = vrot.lane.b32.xlu0 %v205, 56
    %v884 = vpop.permute.xlu0 %883
    %v887 = vsel %vm219, %v806, 0
    %889 = vmatprep.subr.mxu0 0.0
    %890 = vmatpush1.msra.mxu0 %v884
    %891 = vmatprep.subr.mxu0 0.0
    %892 = vmatpush1.msra.mxu0 0.0
    %893 = vmatprep.subr.mxu0 0.0
    %894 = vmatpush1.msra.mxu0 0.0
    %895 = vmatprep.subr.mxu0 0.0
    %896 = vmatpush1.msra.mxu0 0.0
    %897 = vmatprep.subr.mxu0 0.0
    %898 = vmatpush1.msra.mxu0 0.0
    %899 = vmatprep.subr.mxu0 0.0
    %900 = vmatpush1.msra.mxu0 0.0
    %901 = vmatprep.subr.mxu0 0.0
    %902 = vmatpush1.msra.mxu0 0.0
    %903 = vmatprep.subr.mxu0 0.0
    %904 = vmatpush1.msra.mxu0 0.0
    %905 = vmatprep.subr.mxu0 0.0
    %906 = vmatpush1.msra.mxu0 0.0
    %907 = vmatprep.subr.mxu0 0.0
    %908 = vmatpush1.msra.mxu0 0.0
    %909 = vmatprep.subr.mxu0 0.0
    %910 = vmatpush1.msra.mxu0 0.0
    %911 = vmatprep.subr.mxu0 0.0
    %912 = vmatpush1.msra.mxu0 0.0
    %913 = vmatprep.subr.mxu0 0.0
    %914 = vmatpush1.msra.mxu0 0.0
    %915 = vmatprep.subr.mxu0 0.0
    %916 = vmatpush1.msra.mxu0 0.0
    %917 = vmatprep.subr.mxu0 0.0
    %918 = vmatpush1.msra.mxu0 0.0
    %919 = vmatprep.subr.mxu0 0.0
    %920 = vmatpush1.msra.mxu0 0.0
    %921 = vmatprep.subr.mxu0 0.0
    %922 = vmatpush1.msra.mxu0 0.0
    %923 = vmatprep.subr.mxu0 0.0
    %924 = vmatpush1.msra.mxu0 0.0
    %925 = vmatprep.subr.mxu0 0.0
    %926 = vmatpush1.msra.mxu0 0.0
    %927 = vmatprep.subr.mxu0 0.0
    %928 = vmatpush1.msra.mxu0 0.0
    %929 = vmatprep.subr.mxu0 0.0
    %930 = vmatpush1.msra.mxu0 0.0
    %931 = vmatprep.subr.mxu0 0.0
    %932 = vmatpush1.msra.mxu0 0.0
    %933 = vmatprep.subr.mxu0 0.0
    %934 = vmatpush1.msra.mxu0 0.0
    %935 = vmatprep.subr.mxu0 0.0
    %936 = vmatpush1.msra.mxu0 0.0
    %937 = vmatprep.subr.mxu0 0.0
    %938 = vmatpush1.msra.mxu0 0.0
    %939 = vmatprep.subr.mxu0 0.0
    %940 = vmatpush1.msra.mxu0 0.0
    %941 = vmatprep.subr.mxu0 0.0
    %942 = vmatpush1.msra.mxu0 0.0
    %943 = vmatprep.subr.mxu0 0.0
    %944 = vmatpush1.msra.mxu0 0.0
    %945 = vmatprep.subr.mxu0 0.0
    %946 = vmatpush1.msra.mxu0 0.0
    %947 = vmatprep.subr.mxu0 0.0
    %948 = vmatpush1.msra.mxu0 0.0
    %949 = vmatprep.subr.mxu0 0.0
    %950 = vmatpush1.msra.mxu0 0.0
    %951 = vmatprep.subr.mxu0 0.0
    %952 = vmatpush1.msra.mxu0 0.0
    %953 = vmatprep.mubr.f32.mxu0 0.0
    %954 = vmatmul.mubr.f32.gmra.mrb[0].mxu0 %v887
    %v955 = vpop.f32.mrb[0].mxu0
    %v956 = vadd.f32 0.0, %v955
    %v957 = vpop.f32.mrb[0].mxu0
    %958 = vdwg.mxu0
    %v959 = vld [vmem:[#allocation7 + $0x8] sm:$0xff]
    %v961 = vsel %vm219, %v880, 0
    %v964 = vsel %vm219, %v956, 0
    %966 = vmatprep.subr.mxu0 0.0
    %967 = vmatpush1.msra.mxu0 %v959
    %968 = vmatprep.subr.mxu0 0.0
    %969 = vmatpush1.msra.mxu0 0.0
    %970 = vmatprep.subr.mxu0 0.0
    %971 = vmatpush1.msra.mxu0 0.0
    %972 = vmatprep.subr.mxu0 0.0
    %973 = vmatpush1.msra.mxu0 0.0
    %974 = vmatprep.subr.mxu0 0.0
    %975 = vmatpush1.msra.mxu0 0.0
    %976 = vmatprep.subr.mxu0 0.0
    %977 = vmatpush1.msra.mxu0 0.0
    %978 = vmatprep.subr.mxu0 0.0
    %979 = vmatpush1.msra.mxu0 0.0
    %980 = vmatprep.subr.mxu0 0.0
    %981 = vmatpush1.msra.mxu0 0.0
    %982 = vmatprep.subr.mxu0 0.0
    %983 = vmatpush1.msra.mxu0 0.0
    %984 = vmatprep.subr.mxu0 0.0
    %985 = vmatpush1.msra.mxu0 0.0
    %986 = vmatprep.subr.mxu0 0.0
    %987 = vmatpush1.msra.mxu0 0.0
    %988 = vmatprep.subr.mxu0 0.0
    %989 = vmatpush1.msra.mxu0 0.0
    %990 = vmatprep.subr.mxu0 0.0
    %991 = vmatpush1.msra.mxu0 0.0
    %992 = vmatprep.subr.mxu0 0.0
    %993 = vmatpush1.msra.mxu0 0.0
    %994 = vmatprep.subr.mxu0 0.0
    %995 = vmatpush1.msra.mxu0 0.0
    %996 = vmatprep.subr.mxu0 0.0
    %997 = vmatpush1.msra.mxu0 0.0
    %998 = vmatprep.subr.mxu0 0.0
    %999 = vmatpush1.msra.mxu0 0.0
    %1000 = vmatprep.subr.mxu0 0.0
    %1001 = vmatpush1.msra.mxu0 0.0
    %1002 = vmatprep.subr.mxu0 0.0
    %1003 = vmatpush1.msra.mxu0 0.0
    %1004 = vmatprep.subr.mxu0 0.0
    %1005 = vmatpush1.msra.mxu0 0.0
    %1006 = vmatprep.subr.mxu0 0.0
    %1007 = vmatpush1.msra.mxu0 0.0
    %1008 = vmatprep.subr.mxu0 0.0
    %1009 = vmatpush1.msra.mxu0 0.0
    %1010 = vmatprep.subr.mxu0 0.0
    %1011 = vmatpush1.msra.mxu0 0.0
    %1012 = vmatprep.subr.mxu0 0.0
    %1013 = vmatpush1.msra.mxu0 0.0
    %1014 = vmatprep.subr.mxu0 0.0
    %1015 = vmatpush1.msra.mxu0 0.0
    %1016 = vmatprep.subr.mxu0 0.0
    %1017 = vmatpush1.msra.mxu0 0.0
    %1018 = vmatprep.subr.mxu0 0.0
    %1019 = vmatpush1.msra.mxu0 0.0
    %1020 = vmatprep.subr.mxu0 0.0
    %1021 = vmatpush1.msra.mxu0 0.0
    %1022 = vmatprep.subr.mxu0 0.0
    %1023 = vmatpush1.msra.mxu0 0.0
    %1024 = vmatprep.subr.mxu0 0.0
    %1025 = vmatpush1.msra.mxu0 0.0
    %1026 = vmatprep.subr.mxu0 0.0
    %1027 = vmatpush1.msra.mxu0 0.0
    %1028 = vmatprep.subr.mxu0 0.0
    %1029 = vmatpush1.msra.mxu0 0.0
    %1030 = vmatprep.mubr.f32.mxu0 0.0
    %1031 = vmatmul.mubr.f32.gmra.mrb[0].mxu0 %v961
    %v1032 = vpop.f32.mrb[0].mxu0
    %v1033 = vadd.f32 0.0, %v1032
    %v1034 = vpop.f32.mrb[0].mxu0
    %1035 = vmatprep.mubr.f32.mxu0 0.0
    %1036 = vmatmul.mubr.f32.gmra.mrb[0].mxu0 %v964
    %v1037 = vpop.f32.mrb[0].mxu0
    %v1038 = vadd.f32 0.0, %v1037
    %v1039 = vpop.f32.mrb[0].mxu0
    %1040 = vdwg.mxu0
    %v1041 = vadd.f32 %v627, %v1033
    %v1042 = vadd.f32 %v628, %v1038
    %1043 = vrot.lane.b32.xlu0 %v200, 112
    %v1044 = vpop.permute.xlu0 %1043
    %1045 = vrot.lane.b32.xlu0 %v200, 80
    %v1046 = vpop.permute.xlu0 %1045
    %v1047 = vsel %vm219, %v1044, 0
    %v1049 = vsel %vm219, %v1046, 0
    %1051 = vmatprep.subr.mxu0 0.0
    %1052 = vmatpush1.xpose.msra.mxu0 %v1049
    %1053 = vmatprep.subr.mxu0 0.0
    %1054 = vmatpush1.xpose.msra.mxu0 0.0
    %1055 = vmatprep.subr.mxu0 0.0
    %1056 = vmatpush1.xpose.msra.mxu0 0.0
    %1057 = vmatprep.subr.mxu0 0.0
    %1058 = vmatpush1.xpose.msra.mxu0 0.0
    %1059 = vmatprep.subr.mxu0 0.0
    %1060 = vmatpush1.xpose.msra.mxu0 0.0
    %1061 = vmatprep.subr.mxu0 0.0
    %1062 = vmatpush1.xpose.msra.mxu0 0.0
    %1063 = vmatprep.subr.mxu0 0.0
    %1064 = vmatpush1.xpose.msra.mxu0 0.0
    %1065 = vmatprep.subr.mxu0 0.0
    %1066 = vmatpush1.xpose.msra.mxu0 0.0
    %1067 = vmatprep.subr.mxu0 0.0
    %1068 = vmatpush1.xpose.msra.mxu0 0.0
    %1069 = vmatprep.subr.mxu0 0.0
    %1070 = vmatpush1.xpose.msra.mxu0 0.0
    %1071 = vmatprep.subr.mxu0 0.0
    %1072 = vmatpush1.xpose.msra.mxu0 0.0
    %1073 = vmatprep.subr.mxu0 0.0
    %1074 = vmatpush1.xpose.msra.mxu0 0.0
    %1075 = vmatprep.subr.mxu0 0.0
    %1076 = vmatpush1.xpose.msra.mxu0 0.0
    %1077 = vmatprep.subr.mxu0 0.0
    %1078 = vmatpush1.xpose.msra.mxu0 0.0
    %1079 = vmatprep.subr.mxu0 0.0
    %1080 = vmatpush1.xpose.msra.mxu0 0.0
    %1081 = vmatprep.subr.mxu0 0.0
    %1082 = vmatpush1.xpose.msra.mxu0 0.0
    %1083 = vmatprep.subr.mxu0 0.0
    %1084 = vmatpush1.xpose.msra.mxu0 0.0
    %1085 = vmatprep.subr.mxu0 0.0
    %1086 = vmatpush1.xpose.msra.mxu0 0.0
    %1087 = vmatprep.subr.mxu0 0.0
    %1088 = vmatpush1.xpose.msra.mxu0 0.0
    %1089 = vmatprep.subr.mxu0 0.0
    %1090 = vmatpush1.xpose.msra.mxu0 0.0
    %1091 = vmatprep.subr.mxu0 0.0
    %1092 = vmatpush1.xpose.msra.mxu0 0.0
    %1093 = vmatprep.subr.mxu0 0.0
    %1094 = vmatpush1.xpose.msra.mxu0 0.0
    %1095 = vmatprep.subr.mxu0 0.0
    %1096 = vmatpush1.xpose.msra.mxu0 0.0
    %1097 = vmatprep.subr.mxu0 0.0
    %1098 = vmatpush1.xpose.msra.mxu0 0.0
    %1099 = vmatprep.subr.mxu0 0.0
    %1100 = vmatpush1.xpose.msra.mxu0 0.0
    %1101 = vmatprep.subr.mxu0 0.0
    %1102 = vmatpush1.xpose.msra.mxu0 0.0
    %1103 = vmatprep.subr.mxu0 0.0
    %1104 = vmatpush1.xpose.msra.mxu0 0.0
    %1105 = vmatprep.subr.mxu0 0.0
    %1106 = vmatpush1.xpose.msra.mxu0 0.0
    %1107 = vmatprep.subr.mxu0 0.0
    %1108 = vmatpush1.xpose.msra.mxu0 0.0
    %1109 = vmatprep.subr.mxu0 0.0
    %1110 = vmatpush1.xpose.msra.mxu0 0.0
    %1111 = vmatprep.subr.mxu0 0.0
    %1112 = vmatpush1.xpose.msra.mxu0 0.0
    %1113 = vmatprep.subr.mxu0 0.0
    %1114 = vmatpush1.xpose.msra.mxu0 0.0
    %1115 = vmatprep.mubr.f32.mxu0 0.0
    %1116 = vmatmul.mubr.f32.gmra.mrb[0].mxu0 %v1047
    %v1117 = vpop.f32.mrb[0].mxu0
    %v1118 = vadd.f32 0.0, %v1117
    %v1119 = vpop.f32.mrb[0].mxu0
    %1120 = vdwg.mxu0
    %1121 = vrot.lane.b32.xlu0 %v205, 112
    %v1122 = vpop.permute.xlu0 %1121
    %1123 = vrot.lane.b32.xlu0 %v205, 80
    %v1124 = vpop.permute.xlu0 %1123
    %v1125 = vsel %vm219, %v1122, 0
    %v1127 = vsel %vm219, %v1124, 0
    %1129 = vmatprep.subr.mxu0 0.0
    %1130 = vmatpush1.xpose.msra.mxu0 %v1127
    %1131 = vmatprep.subr.mxu0 0.0
    %1132 = vmatpush1.xpose.msra.mxu0 0.0
    %1133 = vmatprep.subr.mxu0 0.0
    %1134 = vmatpush1.xpose.msra.mxu0 0.0
    %1135 = vmatprep.subr.mxu0 0.0
    %1136 = vmatpush1.xpose.msra.mxu0 0.0
    %1137 = vmatprep.subr.mxu0 0.0
    %1138 = vmatpush1.xpose.msra.mxu0 0.0
    %1139 = vmatprep.subr.mxu0 0.0
    %1140 = vmatpush1.xpose.msra.mxu0 0.0
    %1141 = vmatprep.subr.mxu0 0.0
    %1142 = vmatpush1.xpose.msra.mxu0 0.0
    %1143 = vmatprep.subr.mxu0 0.0
    %1144 = vmatpush1.xpose.msra.mxu0 0.0
    %1145 = vmatprep.subr.mxu0 0.0
    %1146 = vmatpush1.xpose.msra.mxu0 0.0
    %1147 = vmatprep.subr.mxu0 0.0
    %1148 = vmatpush1.xpose.msra.mxu0 0.0
    %1149 = vmatprep.subr.mxu0 0.0
    %1150 = vmatpush1.xpose.msra.mxu0 0.0
    %1151 = vmatprep.subr.mxu0 0.0
    %1152 = vmatpush1.xpose.msra.mxu0 0.0
    %1153 = vmatprep.subr.mxu0 0.0
    %1154 = vmatpush1.xpose.msra.mxu0 0.0
    %1155 = vmatprep.subr.mxu0 0.0
    %1156 = vmatpush1.xpose.msra.mxu0 0.0
    %1157 = vmatprep.subr.mxu0 0.0
    %1158 = vmatpush1.xpose.msra.mxu0 0.0
    %1159 = vmatprep.subr.mxu0 0.0
    %1160 = vmatpush1.xpose.msra.mxu0 0.0
    %1161 = vmatprep.subr.mxu0 0.0
    %1162 = vmatpush1.xpose.msra.mxu0 0.0
    %1163 = vmatprep.subr.mxu0 0.0
    %1164 = vmatpush1.xpose.msra.mxu0 0.0
    %1165 = vmatprep.subr.mxu0 0.0
    %1166 = vmatpush1.xpose.msra.mxu0 0.0
    %1167 = vmatprep.subr.mxu0 0.0
    %1168 = vmatpush1.xpose.msra.mxu0 0.0
    %1169 = vmatprep.subr.mxu0 0.0
    %1170 = vmatpush1.xpose.msra.mxu0 0.0
    %1171 = vmatprep.subr.mxu0 0.0
    %1172 = vmatpush1.xpose.msra.mxu0 0.0
    %1173 = vmatprep.subr.mxu0 0.0
    %1174 = vmatpush1.xpose.msra.mxu0 0.0
    %1175 = vmatprep.subr.mxu0 0.0
    %1176 = vmatpush1.xpose.msra.mxu0 0.0
    %1177 = vmatprep.subr.mxu0 0.0
    %1178 = vmatpush1.xpose.msra.mxu0 0.0
    %1179 = vmatprep.subr.mxu0 0.0
    %1180 = vmatpush1.xpose.msra.mxu0 0.0
    %1181 = vmatprep.subr.mxu0 0.0
    %1182 = vmatpush1.xpose.msra.mxu0 0.0
    %1183 = vmatprep.subr.mxu0 0.0
    %1184 = vmatpush1.xpose.msra.mxu0 0.0
    %1185 = vmatprep.subr.mxu0 0.0
    %1186 = vmatpush1.xpose.msra.mxu0 0.0
    %1187 = vmatprep.subr.mxu0 0.0
    %1188 = vmatpush1.xpose.msra.mxu0 0.0
    %1189 = vmatprep.subr.mxu0 0.0
    %1190 = vmatpush1.xpose.msra.mxu0 0.0
    %1191 = vmatprep.subr.mxu0 0.0
    %1192 = vmatpush1.xpose.msra.mxu0 0.0
    %1193 = vmatprep.mubr.f32.mxu0 0.0
    %1194 = vmatmul.mubr.f32.gmra.mrb[0].mxu0 %v1125
    %v1195 = vpop.f32.mrb[0].mxu0
    %v1196 = vadd.f32 0.0, %v1195
    %v1197 = vpop.f32.mrb[0].mxu0
    %1198 = vdwg.mxu0
    %v1199 = vsel %vm219, %v1118, -inf
    %1200 = vmax.xlane.f32.xlu0 %v1199
    %v1201 = vpop.xlane.xlu0 %1200
    %v1202 = vsel %vm219, %v1196, -inf
    %1203 = vmax.xlane.f32.xlu0 %v1202
    %v1204 = vpop.xlane.xlu0 %1203
    %v1205 = vsub.f32 %v1118, %v1201
    %v1206 = vsub.f32 %v1196, %v1204
    %v1207 = vmul.f32 %v1205, 1.442695
    %v1208 = vpow.pop %v1207
    %v1209 = vmul.f32 %v1206, 1.442695
    %v1210 = vpow.pop %v1209
    %v1211 = vsel %vm219, %v1208, 0.0
    %1212 = vadd.xlane.f32.xlu0 %v1211
    %v1213 = vpop.xlane.xlu0 %1212
    %v1214 = vsel %vm219, %v1210, 0.0
    %1215 = vadd.xlane.f32.xlu0 %v1214
    %v1216 = vpop.xlane.xlu0 %1215
    %v1217 = vrcp.pop %v1213
    %v1218 = vrcp.pop %v1216
    %v1219 = vmul.f32 %v1208, %v1217
    %v1220 = vmul.f32 %v1210, %v1218
    %1221 = vrot.lane.b32.xlu0 %v200, 48
    %v1222 = vpop.permute.xlu0 %1221
    %v1225 = vsel %vm219, %v1219, 0
    %1227 = vmatprep.subr.mxu0 0.0
    %1228 = vmatpush1.msra.mxu0 %v1222
    %1229 = vmatprep.subr.mxu0 0.0
    %1230 = vmatpush1.msra.mxu0 0.0
    %1231 = vmatprep.subr.mxu0 0.0
    %1232 = vmatpush1.msra.mxu0 0.0
    %1233 = vmatprep.subr.mxu0 0.0
    %1234 = vmatpush1.msra.mxu0 0.0
    %1235 = vmatprep.subr.mxu0 0.0
    %1236 = vmatpush1.msra.mxu0 0.0
    %1237 = vmatprep.subr.mxu0 0.0
    %1238 = vmatpush1.msra.mxu0 0.0
    %1239 = vmatprep.subr.mxu0 0.0
    %1240 = vmatpush1.msra.mxu0 0.0
    %1241 = vmatprep.subr.mxu0 0.0
    %1242 = vmatpush1.msra.mxu0 0.0
    %1243 = vmatprep.subr.mxu0 0.0
    %1244 = vmatpush1.msra.mxu0 0.0
    %1245 = vmatprep.subr.mxu0 0.0
    %1246 = vmatpush1.msra.mxu0 0.0
    %1247 = vmatprep.subr.mxu0 0.0
    %1248 = vmatpush1.msra.mxu0 0.0
    %1249 = vmatprep.subr.mxu0 0.0
    %1250 = vmatpush1.msra.mxu0 0.0
    %1251 = vmatprep.subr.mxu0 0.0
    %1252 = vmatpush1.msra.mxu0 0.0
    %1253 = vmatprep.subr.mxu0 0.0
    %1254 = vmatpush1.msra.mxu0 0.0
    %1255 = vmatprep.subr.mxu0 0.0
    %1256 = vmatpush1.msra.mxu0 0.0
    %1257 = vmatprep.subr.mxu0 0.0
    %1258 = vmatpush1.msra.mxu0 0.0
    %1259 = vmatprep.subr.mxu0 0.0
    %1260 = vmatpush1.msra.mxu0 0.0
    %1261 = vmatprep.subr.mxu0 0.0
    %1262 = vmatpush1.msra.mxu0 0.0
    %1263 = vmatprep.subr.mxu0 0.0
    %1264 = vmatpush1.msra.mxu0 0.0
    %1265 = vmatprep.subr.mxu0 0.0
    %1266 = vmatpush1.msra.mxu0 0.0
    %1267 = vmatprep.subr.mxu0 0.0
    %1268 = vmatpush1.msra.mxu0 0.0
    %1269 = vmatprep.subr.mxu0 0.0
    %1270 = vmatpush1.msra.mxu0 0.0
    %1271 = vmatprep.subr.mxu0 0.0
    %1272 = vmatpush1.msra.mxu0 0.0
    %1273 = vmatprep.subr.mxu0 0.0
    %1274 = vmatpush1.msra.mxu0 0.0
    %1275 = vmatprep.subr.mxu0 0.0
    %1276 = vmatpush1.msra.mxu0 0.0
    %1277 = vmatprep.subr.mxu0 0.0
    %1278 = vmatpush1.msra.mxu0 0.0
    %1279 = vmatprep.subr.mxu0 0.0
    %1280 = vmatpush1.msra.mxu0 0.0
    %1281 = vmatprep.subr.mxu0 0.0
    %1282 = vmatpush1.msra.mxu0 0.0
    %1283 = vmatprep.subr.mxu0 0.0
    %1284 = vmatpush1.msra.mxu0 0.0
    %1285 = vmatprep.subr.mxu0 0.0
    %1286 = vmatpush1.msra.mxu0 0.0
    %1287 = vmatprep.subr.mxu0 0.0
    %1288 = vmatpush1.msra.mxu0 0.0
    %1289 = vmatprep.subr.mxu0 0.0
    %1290 = vmatpush1.msra.mxu0 0.0
    %1291 = vmatprep.mubr.f32.mxu0 0.0
    %1292 = vmatmul.mubr.f32.gmra.mrb[0].mxu0 %v1225
    %v1293 = vpop.f32.mrb[0].mxu0
    %v1294 = vadd.f32 0.0, %v1293
    %v1295 = vpop.f32.mrb[0].mxu0
    %1296 = vdwg.mxu0
    %1297 = vrot.lane.b32.xlu0 %v205, 48
    %v1298 = vpop.permute.xlu0 %1297
    %v1301 = vsel %vm219, %v1220, 0
    %1303 = vmatprep.subr.mxu0 0.0
    %1304 = vmatpush1.msra.mxu0 %v1298
    %1305 = vmatprep.subr.mxu0 0.0
    %1306 = vmatpush1.msra.mxu0 0.0
    %1307 = vmatprep.subr.mxu0 0.0
    %1308 = vmatpush1.msra.mxu0 0.0
    %1309 = vmatprep.subr.mxu0 0.0
    %1310 = vmatpush1.msra.mxu0 0.0
    %1311 = vmatprep.subr.mxu0 0.0
    %1312 = vmatpush1.msra.mxu0 0.0
    %1313 = vmatprep.subr.mxu0 0.0
    %1314 = vmatpush1.msra.mxu0 0.0
    %1315 = vmatprep.subr.mxu0 0.0
    %1316 = vmatpush1.msra.mxu0 0.0
    %1317 = vmatprep.subr.mxu0 0.0
    %1318 = vmatpush1.msra.mxu0 0.0
    %1319 = vmatprep.subr.mxu0 0.0
    %1320 = vmatpush1.msra.mxu0 0.0
    %1321 = vmatprep.subr.mxu0 0.0
    %1322 = vmatpush1.msra.mxu0 0.0
    %1323 = vmatprep.subr.mxu0 0.0
    %1324 = vmatpush1.msra.mxu0 0.0
    %1325 = vmatprep.subr.mxu0 0.0
    %1326 = vmatpush1.msra.mxu0 0.0
    %1327 = vmatprep.subr.mxu0 0.0
    %1328 = vmatpush1.msra.mxu0 0.0
    %1329 = vmatprep.subr.mxu0 0.0
    %1330 = vmatpush1.msra.mxu0 0.0
    %1331 = vmatprep.subr.mxu0 0.0
    %1332 = vmatpush1.msra.mxu0 0.0
    %1333 = vmatprep.subr.mxu0 0.0
    %1334 = vmatpush1.msra.mxu0 0.0
    %1335 = vmatprep.subr.mxu0 0.0
    %1336 = vmatpush1.msra.mxu0 0.0
    %1337 = vmatprep.subr.mxu0 0.0
    %1338 = vmatpush1.msra.mxu0 0.0
    %1339 = vmatprep.subr.mxu0 0.0
    %1340 = vmatpush1.msra.mxu0 0.0
    %1341 = vmatprep.subr.mxu0 0.0
    %1342 = vmatpush1.msra.mxu0 0.0
    %1343 = vmatprep.subr.mxu0 0.0
    %1344 = vmatpush1.msra.mxu0 0.0
    %1345 = vmatprep.subr.mxu0 0.0
    %1346 = vmatpush1.msra.mxu0 0.0
    %1347 = vmatprep.subr.mxu0 0.0
    %1348 = vmatpush1.msra.mxu0 0.0
    %1349 = vmatprep.subr.mxu0 0.0
    %1350 = vmatpush1.msra.mxu0 0.0
    %1351 = vmatprep.subr.mxu0 0.0
    %1352 = vmatpush1.msra.mxu0 0.0
    %1353 = vmatprep.subr.mxu0 0.0
    %1354 = vmatpush1.msra.mxu0 0.0
    %1355 = vmatprep.subr.mxu0 0.0
    %1356 = vmatpush1.msra.mxu0 0.0
    %1357 = vmatprep.subr.mxu0 0.0
    %1358 = vmatpush1.msra.mxu0 0.0
    %1359 = vmatprep.subr.mxu0 0.0
    %1360 = vmatpush1.msra.mxu0 0.0
    %1361 = vmatprep.subr.mxu0 0.0
    %1362 = vmatpush1.msra.mxu0 0.0
    %1363 = vmatprep.subr.mxu0 0.0
    %1364 = vmatpush1.msra.mxu0 0.0
    %1365 = vmatprep.subr.mxu0 0.0
    %1366 = vmatpush1.msra.mxu0 0.0
    %1367 = vmatprep.mubr.f32.mxu0 0.0
    %1368 = vmatmul.mubr.f32.gmra.mrb[0].mxu0 %v1301
    %v1369 = vpop.f32.mrb[0].mxu0
    %v1370 = vadd.f32 0.0, %v1369
    %v1371 = vpop.f32.mrb[0].mxu0
    %1372 = vdwg.mxu0
    %v1373 = vld [vmem:[#allocation7 + $0x10] sm:$0xff]
    %v1375 = vsel %vm219, %v1294, 0
    %v1378 = vsel %vm219, %v1370, 0
    %1380 = vmatprep.subr.mxu0 0.0
    %1381 = vmatpush1.msra.mxu0 %v1373
    %1382 = vmatprep.subr.mxu0 0.0
    %1383 = vmatpush1.msra.mxu0 0.0
    %1384 = vmatprep.subr.mxu0 0.0
    %1385 = vmatpush1.msra.mxu0 0.0
    %1386 = vmatprep.subr.mxu0 0.0
    %1387 = vmatpush1.msra.mxu0 0.0
    %1388 = vmatprep.subr.mxu0 0.0
    %1389 = vmatpush1.msra.mxu0 0.0
    %1390 = vmatprep.subr.mxu0 0.0
    %1391 = vmatpush1.msra.mxu0 0.0
    %1392 = vmatprep.subr.mxu0 0.0
    %1393 = vmatpush1.msra.mxu0 0.0
    %1394 = vmatprep.subr.mxu0 0.0
    %1395 = vmatpush1.msra.mxu0 0.0
    %1396 = vmatprep.subr.mxu0 0.0
    %1397 = vmatpush1.msra.mxu0 0.0
    %1398 = vmatprep.subr.mxu0 0.0
    %1399 = vmatpush1.msra.mxu0 0.0
    %1400 = vmatprep.subr.mxu0 0.0
    %1401 = vmatpush1.msra.mxu0 0.0
    %1402 = vmatprep.subr.mxu0 0.0
    %1403 = vmatpush1.msra.mxu0 0.0
    %1404 = vmatprep.subr.mxu0 0.0
    %1405 = vmatpush1.msra.mxu0 0.0
    %1406 = vmatprep.subr.mxu0 0.0
    %1407 = vmatpush1.msra.mxu0 0.0
    %1408 = vmatprep.subr.mxu0 0.0
    %1409 = vmatpush1.msra.mxu0 0.0
    %1410 = vmatprep.subr.mxu0 0.0
    %1411 = vmatpush1.msra.mxu0 0.0
    %1412 = vmatprep.subr.mxu0 0.0
    %1413 = vmatpush1.msra.mxu0 0.0
    %1414 = vmatprep.subr.mxu0 0.0
    %1415 = vmatpush1.msra.mxu0 0.0
    %1416 = vmatprep.subr.mxu0 0.0
    %1417 = vmatpush1.msra.mxu0 0.0
    %1418 = vmatprep.subr.mxu0 0.0
    %1419 = vmatpush1.msra.mxu0 0.0
    %1420 = vmatprep.subr.mxu0 0.0
    %1421 = vmatpush1.msra.mxu0 0.0
    %1422 = vmatprep.subr.mxu0 0.0
    %1423 = vmatpush1.msra.mxu0 0.0
    %1424 = vmatprep.subr.mxu0 0.0
    %1425 = vmatpush1.msra.mxu0 0.0
    %1426 = vmatprep.subr.mxu0 0.0
    %1427 = vmatpush1.msra.mxu0 0.0
    %1428 = vmatprep.subr.mxu0 0.0
    %1429 = vmatpush1.msra.mxu0 0.0
    %1430 = vmatprep.subr.mxu0 0.0
    %1431 = vmatpush1.msra.mxu0 0.0
    %1432 = vmatprep.subr.mxu0 0.0
    %1433 = vmatpush1.msra.mxu0 0.0
    %1434 = vmatprep.subr.mxu0 0.0
    %1435 = vmatpush1.msra.mxu0 0.0
    %1436 = vmatprep.subr.mxu0 0.0
    %1437 = vmatpush1.msra.mxu0 0.0
    %1438 = vmatprep.subr.mxu0 0.0
    %1439 = vmatpush1.msra.mxu0 0.0
    %1440 = vmatprep.subr.mxu0 0.0
    %1441 = vmatpush1.msra.mxu0 0.0
    %1442 = vmatprep.subr.mxu0 0.0
    %1443 = vmatpush1.msra.mxu0 0.0
    %1444 = vmatprep.mubr.f32.mxu0 0.0
    %1445 = vmatmul.mubr.f32.gmra.mrb[0].mxu0 %v1375
    %v1446 = vpop.f32.mrb[0].mxu0
    %v1447 = vadd.f32 0.0, %v1446
    %v1448 = vpop.f32.mrb[0].mxu0
    %1449 = vmatprep.mubr.f32.mxu0 0.0
    %1450 = vmatmul.mubr.f32.gmra.mrb[0].mxu0 %v1378
    %v1451 = vpop.f32.mrb[0].mxu0
    %v1452 = vadd.f32 0.0, %v1451
    %v1453 = vpop.f32.mrb[0].mxu0
    %1454 = vdwg.mxu0
    %v1455 = vadd.f32 %v1041, %v1447
    %v1456 = vadd.f32 %v1042, %v1452
    %1457 = vrot.lane.b32.xlu0 %v200, 104
    %v1458 = vpop.permute.xlu0 %1457
    %1459 = vrot.lane.b32.xlu0 %v200, 72
    %v1460 = vpop.permute.xlu0 %1459
    %v1461 = vsel %vm219, %v1458, 0
    %v1463 = vsel %vm219, %v1460, 0
    %1465 = vmatprep.subr.mxu0 0.0
    %1466 = vmatpush1.xpose.msra.mxu0 %v1463
    %1467 = vmatprep.subr.mxu0 0.0
    %1468 = vmatpush1.xpose.msra.mxu0 0.0
    %1469 = vmatprep.subr.mxu0 0.0
    %1470 = vmatpush1.xpose.msra.mxu0 0.0
    %1471 = vmatprep.subr.mxu0 0.0
    %1472 = vmatpush1.xpose.msra.mxu0 0.0
    %1473 = vmatprep.subr.mxu0 0.0
    %1474 = vmatpush1.xpose.msra.mxu0 0.0
    %1475 = vmatprep.subr.mxu0 0.0
    %1476 = vmatpush1.xpose.msra.mxu0 0.0
    %1477 = vmatprep.subr.mxu0 0.0
    %1478 = vmatpush1.xpose.msra.mxu0 0.0
    %1479 = vmatprep.subr.mxu0 0.0
    %1480 = vmatpush1.xpose.msra.mxu0 0.0
    %1481 = vmatprep.subr.mxu0 0.0
    %1482 = vmatpush1.xpose.msra.mxu0 0.0
    %1483 = vmatprep.subr.mxu0 0.0
    %1484 = vmatpush1.xpose.msra.mxu0 0.0
    %1485 = vmatprep.subr.mxu0 0.0
    %1486 = vmatpush1.xpose.msra.mxu0 0.0
    %1487 = vmatprep.subr.mxu0 0.0
    %1488 = vmatpush1.xpose.msra.mxu0 0.0
    %1489 = vmatprep.subr.mxu0 0.0
    %1490 = vmatpush1.xpose.msra.mxu0 0.0
    %1491 = vmatprep.subr.mxu0 0.0
    %1492 = vmatpush1.xpose.msra.mxu0 0.0
    %1493 = vmatprep.subr.mxu0 0.0
    %1494 = vmatpush1.xpose.msra.mxu0 0.0
    %1495 = vmatprep.subr.mxu0 0.0
    %1496 = vmatpush1.xpose.msra.mxu0 0.0
    %1497 = vmatprep.subr.mxu0 0.0
    %1498 = vmatpush1.xpose.msra.mxu0 0.0
    %1499 = vmatprep.subr.mxu0 0.0
    %1500 = vmatpush1.xpose.msra.mxu0 0.0
    %1501 = vmatprep.subr.mxu0 0.0
    %1502 = vmatpush1.xpose.msra.mxu0 0.0
    %1503 = vmatprep.subr.mxu0 0.0
    %1504 = vmatpush1.xpose.msra.mxu0 0.0
    %1505 = vmatprep.subr.mxu0 0.0
    %1506 = vmatpush1.xpose.msra.mxu0 0.0
    %1507 = vmatprep.subr.mxu0 0.0
    %1508 = vmatpush1.xpose.msra.mxu0 0.0
    %1509 = vmatprep.subr.mxu0 0.0
    %1510 = vmatpush1.xpose.msra.mxu0 0.0
    %1511 = vmatprep.subr.mxu0 0.0
    %1512 = vmatpush1.xpose.msra.mxu0 0.0
    %1513 = vmatprep.subr.mxu0 0.0
    %1514 = vmatpush1.xpose.msra.mxu0 0.0
    %1515 = vmatprep.subr.mxu0 0.0
    %1516 = vmatpush1.xpose.msra.mxu0 0.0
    %1517 = vmatprep.subr.mxu0 0.0
    %1518 = vmatpush1.xpose.msra.mxu0 0.0
    %1519 = vmatprep.subr.mxu0 0.0
    %1520 = vmatpush1.xpose.msra.mxu0 0.0
    %1521 = vmatprep.subr.mxu0 0.0
    %1522 = vmatpush1.xpose.msra.mxu0 0.0
    %1523 = vmatprep.subr.mxu0 0.0
    %1524 = vmatpush1.xpose.msra.mxu0 0.0
    %1525 = vmatprep.subr.mxu0 0.0
    %1526 = vmatpush1.xpose.msra.mxu0 0.0
    %1527 = vmatprep.subr.mxu0 0.0
    %1528 = vmatpush1.xpose.msra.mxu0 0.0
    %1529 = vmatprep.mubr.f32.mxu0 0.0
    %1530 = vmatmul.mubr.f32.gmra.mrb[0].mxu0 %v1461
    %v1531 = vpop.f32.mrb[0].mxu0
    %v1532 = vadd.f32 0.0, %v1531
    %v1533 = vpop.f32.mrb[0].mxu0
    %1534 = vdwg.mxu0
    %1535 = vrot.lane.b32.xlu0 %v205, 104
    %v1536 = vpop.permute.xlu0 %1535
    %1537 = vrot.lane.b32.xlu0 %v205, 72
    %v1538 = vpop.permute.xlu0 %1537
    %v1539 = vsel %vm219, %v1536, 0
    %v1541 = vsel %vm219, %v1538, 0
    %1543 = vmatprep.subr.mxu0 0.0
    %1544 = vmatpush1.xpose.msra.mxu0 %v1541
    %1545 = vmatprep.subr.mxu0 0.0
    %1546 = vmatpush1.xpose.msra.mxu0 0.0
    %1547 = vmatprep.subr.mxu0 0.0
    %1548 = vmatpush1.xpose.msra.mxu0 0.0
    %1549 = vmatprep.subr.mxu0 0.0
    %1550 = vmatpush1.xpose.msra.mxu0 0.0
    %1551 = vmatprep.subr.mxu0 0.0
    %1552 = vmatpush1.xpose.msra.mxu0 0.0
    %1553 = vmatprep.subr.mxu0 0.0
    %1554 = vmatpush1.xpose.msra.mxu0 0.0
    %1555 = vmatprep.subr.mxu0 0.0
    %1556 = vmatpush1.xpose.msra.mxu0 0.0
    %1557 = vmatprep.subr.mxu0 0.0
    %1558 = vmatpush1.xpose.msra.mxu0 0.0
    %1559 = vmatprep.subr.mxu0 0.0
    %1560 = vmatpush1.xpose.msra.mxu0 0.0
    %1561 = vmatprep.subr.mxu0 0.0
    %1562 = vmatpush1.xpose.msra.mxu0 0.0
    %1563 = vmatprep.subr.mxu0 0.0
    %1564 = vmatpush1.xpose.msra.mxu0 0.0
    %1565 = vmatprep.subr.mxu0 0.0
    %1566 = vmatpush1.xpose.msra.mxu0 0.0
    %1567 = vmatprep.subr.mxu0 0.0
    %1568 = vmatpush1.xpose.msra.mxu0 0.0
    %1569 = vmatprep.subr.mxu0 0.0
    %1570 = vmatpush1.xpose.msra.mxu0 0.0
    %1571 = vmatprep.subr.mxu0 0.0
    %1572 = vmatpush1.xpose.msra.mxu0 0.0
    %1573 = vmatprep.subr.mxu0 0.0
    %1574 = vmatpush1.xpose.msra.mxu0 0.0
    %1575 = vmatprep.subr.mxu0 0.0
    %1576 = vmatpush1.xpose.msra.mxu0 0.0
    %1577 = vmatprep.subr.mxu0 0.0
    %1578 = vmatpush1.xpose.msra.mxu0 0.0
    %1579 = vmatprep.subr.mxu0 0.0
    %1580 = vmatpush1.xpose.msra.mxu0 0.0
    %1581 = vmatprep.subr.mxu0 0.0
    %1582 = vmatpush1.xpose.msra.mxu0 0.0
    %1583 = vmatprep.subr.mxu0 0.0
    %1584 = vmatpush1.xpose.msra.mxu0 0.0
    %1585 = vmatprep.subr.mxu0 0.0
    %1586 = vmatpush1.xpose.msra.mxu0 0.0
    %1587 = vmatprep.subr.mxu0 0.0
    %1588 = vmatpush1.xpose.msra.mxu0 0.0
    %1589 = vmatprep.subr.mxu0 0.0
    %1590 = vmatpush1.xpose.msra.mxu0 0.0
    %1591 = vmatprep.subr.mxu0 0.0
    %1592 = vmatpush1.xpose.msra.mxu0 0.0
    %1593 = vmatprep.subr.mxu0 0.0
    %1594 = vmatpush1.xpose.msra.mxu0 0.0
    %1595 = vmatprep.subr.mxu0 0.0
    %1596 = vmatpush1.xpose.msra.mxu0 0.0
    %1597 = vmatprep.subr.mxu0 0.0
    %1598 = vmatpush1.xpose.msra.mxu0 0.0
    %1599 = vmatprep.subr.mxu0 0.0
    %1600 = vmatpush1.xpose.msra.mxu0 0.0
    %1601 = vmatprep.subr.mxu0 0.0
    %1602 = vmatpush1.xpose.msra.mxu0 0.0
    %1603 = vmatprep.subr.mxu0 0.0
    %1604 = vmatpush1.xpose.msra.mxu0 0.0
    %1605 = vmatprep.subr.mxu0 0.0
    %1606 = vmatpush1.xpose.msra.mxu0 0.0
    %1607 = vmatprep.mubr.f32.mxu0 0.0
    %1608 = vmatmul.mubr.f32.gmra.mrb[0].mxu0 %v1539
    %v1609 = vpop.f32.mrb[0].mxu0
    %v1610 = vadd.f32 0.0, %v1609
    %v1611 = vpop.f32.mrb[0].mxu0
    %1612 = vdwg.mxu0
    %v1613 = vsel %vm219, %v1532, -inf
    %1614 = vmax.xlane.f32.xlu0 %v1613
    %v1615 = vpop.xlane.xlu0 %1614
    %v1616 = vsel %vm219, %v1610, -inf
    %1617 = vmax.xlane.f32.xlu0 %v1616
    %v1618 = vpop.xlane.xlu0 %1617
    %v1619 = vsub.f32 %v1532, %v1615
    %v1620 = vsub.f32 %v1610, %v1618
    %v1621 = vmul.f32 %v1619, 1.442695
    %v1622 = vpow.pop %v1621
    %v1623 = vmul.f32 %v1620, 1.442695
    %v1624 = vpow.pop %v1623
    %v1625 = vsel %vm219, %v1622, 0.0
    %1626 = vadd.xlane.f32.xlu0 %v1625
    %v1627 = vpop.xlane.xlu0 %1626
    %v1628 = vsel %vm219, %v1624, 0.0
    %1629 = vadd.xlane.f32.xlu0 %v1628
    %v1630 = vpop.xlane.xlu0 %1629
    %v1631 = vrcp.pop %v1627
    %v1632 = vrcp.pop %v1630
    %v1633 = vmul.f32 %v1622, %v1631
    %v1634 = vmul.f32 %v1624, %v1632
    %1635 = vrot.lane.b32.xlu0 %v200, 40
    %v1636 = vpop.permute.xlu0 %1635
    %v1639 = vsel %vm219, %v1633, 0
    %1641 = vmatprep.subr.mxu0 0.0
    %1642 = vmatpush1.msra.mxu0 %v1636
    %1643 = vmatprep.subr.mxu0 0.0
    %1644 = vmatpush1.msra.mxu0 0.0
    %1645 = vmatprep.subr.mxu0 0.0
    %1646 = vmatpush1.msra.mxu0 0.0
    %1647 = vmatprep.subr.mxu0 0.0
    %1648 = vmatpush1.msra.mxu0 0.0
    %1649 = vmatprep.subr.mxu0 0.0
    %1650 = vmatpush1.msra.mxu0 0.0
    %1651 = vmatprep.subr.mxu0 0.0
    %1652 = vmatpush1.msra.mxu0 0.0
    %1653 = vmatprep.subr.mxu0 0.0
    %1654 = vmatpush1.msra.mxu0 0.0
    %1655 = vmatprep.subr.mxu0 0.0
    %1656 = vmatpush1.msra.mxu0 0.0
    %1657 = vmatprep.subr.mxu0 0.0
    %1658 = vmatpush1.msra.mxu0 0.0
    %1659 = vmatprep.subr.mxu0 0.0
    %1660 = vmatpush1.msra.mxu0 0.0
    %1661 = vmatprep.subr.mxu0 0.0
    %1662 = vmatpush1.msra.mxu0 0.0
    %1663 = vmatprep.subr.mxu0 0.0
    %1664 = vmatpush1.msra.mxu0 0.0
    %1665 = vmatprep.subr.mxu0 0.0
    %1666 = vmatpush1.msra.mxu0 0.0
    %1667 = vmatprep.subr.mxu0 0.0
    %1668 = vmatpush1.msra.mxu0 0.0
    %1669 = vmatprep.subr.mxu0 0.0
    %1670 = vmatpush1.msra.mxu0 0.0
    %1671 = vmatprep.subr.mxu0 0.0
    %1672 = vmatpush1.msra.mxu0 0.0
    %1673 = vmatprep.subr.mxu0 0.0
    %1674 = vmatpush1.msra.mxu0 0.0
    %1675 = vmatprep.subr.mxu0 0.0
    %1676 = vmatpush1.msra.mxu0 0.0
    %1677 = vmatprep.subr.mxu0 0.0
    %1678 = vmatpush1.msra.mxu0 0.0
    %1679 = vmatprep.subr.mxu0 0.0
    %1680 = vmatpush1.msra.mxu0 0.0
    %1681 = vmatprep.subr.mxu0 0.0
    %1682 = vmatpush1.msra.mxu0 0.0
    %1683 = vmatprep.subr.mxu0 0.0
    %1684 = vmatpush1.msra.mxu0 0.0
    %1685 = vmatprep.subr.mxu0 0.0
    %1686 = vmatpush1.msra.mxu0 0.0
    %1687 = vmatprep.subr.mxu0 0.0
    %1688 = vmatpush1.msra.mxu0 0.0
    %1689 = vmatprep.subr.mxu0 0.0
    %1690 = vmatpush1.msra.mxu0 0.0
    %1691 = vmatprep.subr.mxu0 0.0
    %1692 = vmatpush1.msra.mxu0 0.0
    %1693 = vmatprep.subr.mxu0 0.0
    %1694 = vmatpush1.msra.mxu0 0.0
    %1695 = vmatprep.subr.mxu0 0.0
    %1696 = vmatpush1.msra.mxu0 0.0
    %1697 = vmatprep.subr.mxu0 0.0
    %1698 = vmatpush1.msra.mxu0 0.0
    %1699 = vmatprep.subr.mxu0 0.0
    %1700 = vmatpush1.msra.mxu0 0.0
    %1701 = vmatprep.subr.mxu0 0.0
    %1702 = vmatpush1.msra.mxu0 0.0
    %1703 = vmatprep.subr.mxu0 0.0
    %1704 = vmatpush1.msra.mxu0 0.0
    %1705 = vmatprep.mubr.f32.mxu0 0.0
    %1706 = vmatmul.mubr.f32.gmra.mrb[0].mxu0 %v1639
    %v1707 = vpop.f32.mrb[0].mxu0
    %v1708 = vadd.f32 0.0, %v1707
    %v1709 = vpop.f32.mrb[0].mxu0
    %1710 = vdwg.mxu0
    %1711 = vrot.lane.b32.xlu0 %v205, 40
    %v1712 = vpop.permute.xlu0 %1711
    %v1715 = vsel %vm219, %v1634, 0
    %1717 = vmatprep.subr.mxu0 0.0
    %1718 = vmatpush1.msra.mxu0 %v1712
    %1719 = vmatprep.subr.mxu0 0.0
    %1720 = vmatpush1.msra.mxu0 0.0
    %1721 = vmatprep.subr.mxu0 0.0
    %1722 = vmatpush1.msra.mxu0 0.0
    %1723 = vmatprep.subr.mxu0 0.0
    %1724 = vmatpush1.msra.mxu0 0.0
    %1725 = vmatprep.subr.mxu0 0.0
    %1726 = vmatpush1.msra.mxu0 0.0
    %1727 = vmatprep.subr.mxu0 0.0
    %1728 = vmatpush1.msra.mxu0 0.0
    %1729 = vmatprep.subr.mxu0 0.0
    %1730 = vmatpush1.msra.mxu0 0.0
    %1731 = vmatprep.subr.mxu0 0.0
    %1732 = vmatpush1.msra.mxu0 0.0
    %1733 = vmatprep.subr.mxu0 0.0
    %1734 = vmatpush1.msra.mxu0 0.0
    %1735 = vmatprep.subr.mxu0 0.0
    %1736 = vmatpush1.msra.mxu0 0.0
    %1737 = vmatprep.subr.mxu0 0.0
    %1738 = vmatpush1.msra.mxu0 0.0
    %1739 = vmatprep.subr.mxu0 0.0
    %1740 = vmatpush1.msra.mxu0 0.0
    %1741 = vmatprep.subr.mxu0 0.0
    %1742 = vmatpush1.msra.mxu0 0.0
    %1743 = vmatprep.subr.mxu0 0.0
    %1744 = vmatpush1.msra.mxu0 0.0
    %1745 = vmatprep.subr.mxu0 0.0
    %1746 = vmatpush1.msra.mxu0 0.0
    %1747 = vmatprep.subr.mxu0 0.0
    %1748 = vmatpush1.msra.mxu0 0.0
    %1749 = vmatprep.subr.mxu0 0.0
    %1750 = vmatpush1.msra.mxu0 0.0
    %1751 = vmatprep.subr.mxu0 0.0
    %1752 = vmatpush1.msra.mxu0 0.0
    %1753 = vmatprep.subr.mxu0 0.0
    %1754 = vmatpush1.msra.mxu0 0.0
    %1755 = vmatprep.subr.mxu0 0.0
    %1756 = vmatpush1.msra.mxu0 0.0
    %1757 = vmatprep.subr.mxu0 0.0
    %1758 = vmatpush1.msra.mxu0 0.0
    %1759 = vmatprep.subr.mxu0 0.0
    %1760 = vmatpush1.msra.mxu0 0.0
    %1761 = vmatprep.subr.mxu0 0.0
    %1762 = vmatpush1.msra.mxu0 0.0
    %1763 = vmatprep.subr.mxu0 0.0
    %1764 = vmatpush1.msra.mxu0 0.0
    %1765 = vmatprep.subr.mxu0 0.0
    %1766 = vmatpush1.msra.mxu0 0.0
    %1767 = vmatprep.subr.mxu0 0.0
    %1768 = vmatpush1.msra.mxu0 0.0
    %1769 = vmatprep.subr.mxu0 0.0
    %1770 = vmatpush1.msra.mxu0 0.0
    %1771 = vmatprep.subr.mxu0 0.0
    %1772 = vmatpush1.msra.mxu0 0.0
    %1773 = vmatprep.subr.mxu0 0.0
    %1774 = vmatpush1.msra.mxu0 0.0
    %1775 = vmatprep.subr.mxu0 0.0
    %1776 = vmatpush1.msra.mxu0 0.0
    %1777 = vmatprep.subr.mxu0 0.0
    %1778 = vmatpush1.msra.mxu0 0.0
    %1779 = vmatprep.subr.mxu0 0.0
    %1780 = vmatpush1.msra.mxu0 0.0
    %1781 = vmatprep.mubr.f32.mxu0 0.0
    %1782 = vmatmul.mubr.f32.gmra.mrb[0].mxu0 %v1715
    %v1783 = vpop.f32.mrb[0].mxu0
    %v1784 = vadd.f32 0.0, %v1783
    %v1785 = vpop.f32.mrb[0].mxu0
    %1786 = vdwg.mxu0
    %v1787 = vld [vmem:[#allocation7 + $0x18] sm:$0xff]
    %v1789 = vsel %vm219, %v1708, 0
    %v1792 = vsel %vm219, %v1784, 0
    %1794 = vmatprep.subr.mxu0 0.0
    %1795 = vmatpush1.msra.mxu0 %v1787
    %1796 = vmatprep.subr.mxu0 0.0
    %1797 = vmatpush1.msra.mxu0 0.0
    %1798 = vmatprep.subr.mxu0 0.0
    %1799 = vmatpush1.msra.mxu0 0.0
    %1800 = vmatprep.subr.mxu0 0.0
    %1801 = vmatpush1.msra.mxu0 0.0
    %1802 = vmatprep.subr.mxu0 0.0
    %1803 = vmatpush1.msra.mxu0 0.0
    %1804 = vmatprep.subr.mxu0 0.0
    %1805 = vmatpush1.msra.mxu0 0.0
    %1806 = vmatprep.subr.mxu0 0.0
    %1807 = vmatpush1.msra.mxu0 0.0
    %1808 = vmatprep.subr.mxu0 0.0
    %1809 = vmatpush1.msra.mxu0 0.0
    %1810 = vmatprep.subr.mxu0 0.0
    %1811 = vmatpush1.msra.mxu0 0.0
    %1812 = vmatprep.subr.mxu0 0.0
    %1813 = vmatpush1.msra.mxu0 0.0
    %1814 = vmatprep.subr.mxu0 0.0
    %1815 = vmatpush1.msra.mxu0 0.0
    %1816 = vmatprep.subr.mxu0 0.0
    %1817 = vmatpush1.msra.mxu0 0.0
    %1818 = vmatprep.subr.mxu0 0.0
    %1819 = vmatpush1.msra.mxu0 0.0
    %1820 = vmatprep.subr.mxu0 0.0
    %1821 = vmatpush1.msra.mxu0 0.0
    %1822 = vmatprep.subr.mxu0 0.0
    %1823 = vmatpush1.msra.mxu0 0.0
    %1824 = vmatprep.subr.mxu0 0.0
    %1825 = vmatpush1.msra.mxu0 0.0
    %1826 = vmatprep.subr.mxu0 0.0
    %1827 = vmatpush1.msra.mxu0 0.0
    %1828 = vmatprep.subr.mxu0 0.0
    %1829 = vmatpush1.msra.mxu0 0.0
    %1830 = vmatprep.subr.mxu0 0.0
    %1831 = vmatpush1.msra.mxu0 0.0
    %1832 = vmatprep.subr.mxu0 0.0
    %1833 = vmatpush1.msra.mxu0 0.0
    %1834 = vmatprep.subr.mxu0 0.0
    %1835 = vmatpush1.msra.mxu0 0.0
    %1836 = vmatprep.subr.mxu0 0.0
    %1837 = vmatpush1.msra.mxu0 0.0
    %1838 = vmatprep.subr.mxu0 0.0
    %1839 = vmatpush1.msra.mxu0 0.0
    %1840 = vmatprep.subr.mxu0 0.0
    %1841 = vmatpush1.msra.mxu0 0.0
    %1842 = vmatprep.subr.mxu0 0.0
    %1843 = vmatpush1.msra.mxu0 0.0
    %1844 = vmatprep.subr.mxu0 0.0
    %1845 = vmatpush1.msra.mxu0 0.0
    %1846 = vmatprep.subr.mxu0 0.0
    %1847 = vmatpush1.msra.mxu0 0.0
    %1848 = vmatprep.subr.mxu0 0.0
    %1849 = vmatpush1.msra.mxu0 0.0
    %1850 = vmatprep.subr.mxu0 0.0
    %1851 = vmatpush1.msra.mxu0 0.0
    %1852 = vmatprep.subr.mxu0 0.0
    %1853 = vmatpush1.msra.mxu0 0.0
    %1854 = vmatprep.subr.mxu0 0.0
    %1855 = vmatpush1.msra.mxu0 0.0
    %1856 = vmatprep.subr.mxu0 0.0
    %1857 = vmatpush1.msra.mxu0 0.0
    %1858 = vmatprep.mubr.f32.mxu0 0.0
    %1859 = vmatmul.mubr.f32.gmra.mrb[0].mxu0 %v1789
    %v1860 = vpop.f32.mrb[0].mxu0
    %v1861 = vadd.f32 0.0, %v1860
    %v1862 = vpop.f32.mrb[0].mxu0
    %1863 = vmatprep.mubr.f32.mxu0 0.0
    %1864 = vmatmul.mubr.f32.gmra.mrb[0].mxu0 %v1792
    %v1865 = vpop.f32.mrb[0].mxu0
    %v1866 = vadd.f32 0.0, %v1865
    %v1867 = vpop.f32.mrb[0].mxu0
    %1868 = vdwg.mxu0
    %v1869 = vadd.f32 %v1455, %v1861
    %v1870 = vadd.f32 %v1456, %v1866
    %1871 = vst.msk [vmem:[#allocation8] sm:$0xff] %vm70, %v1869
    %1872 = vst.msk [vmem:[#allocation8 + $0x8] sm:$0xff] %vm70, %v1870
    // Predicated region
    $region42: #{tpu_custom_call.1} parent=1 // pred_check
      _
    $region43: #{tpu_custom_call.1} parent=1 // pred_check_branch
      %1874 = sbr.rel (0) target = $region45
    $region44: #{tpu_custom_call.1} parent=1 // pred_region
      %s1876 = ssub.s32 256, 256
      %1877 = vsyncadd [#allocation4], %s1876
      %s1878 = sshll.u32 [#allocation8], 4
      %s1879 = int_to_ptr.vmem [resolvable:$true] %s1878
      %1884 = dma.vmem_to_hbm [thread:$0]  %s1879, 256, %s7, [#allocation4], 128, 128, 8
    $region45: #{tpu_custom_call.1} parent=1 // pred_fallthru
      _
    // Predicated region
    $region46: #{tpu_custom_call.1} parent=1 // pred_check
      _
    $region47: #{tpu_custom_call.1} parent=1 // pred_check_branch
      %1886 = sbr.rel (0) target = $region49
    $region48: #{tpu_custom_call.1} parent=1 // pred_region
      %1887 = dma.done [#allocation4], 256
    $region49: #{tpu_custom_call.1} parent=1 // pred_fallthru
      _
    %1888 = vsyncpa [#allocation3], 1
    %1889 = vsyncpa [#allocation6], 1
    %1890 = vsyncpa [#allocation4], 1

</llo_original>
